<compile_context>
chip_gen: v7x
topology: tpu7x:2x2x1
jax: 0.10.0
libtpu: 0.0.40
codegen_flags: <defaults>
</compile_context>

<pallas_src>
import functools

import jax
import jax.numpy as jnp
from jax.experimental import pallas as pl
from jax.experimental.pallas import tpu as pltpu

LANE = 128


def _round_up(v, m):
    return (v + m - 1) // m * m


# ----------------------------- Pallas kernels ---------------------------------
def _gcn_layer1_kernel(a_ref, x_ref, w1_ref, b1_ref, w2_ref, t_ref, acc_ref):
    """t = relu((A @ x) @ W1 + b1) @ W2   for one row-tile of nodes."""
    k = pl.program_id(1)

    @pl.when(k == 0)
    def _():
        acc_ref[...] = jnp.zeros_like(acc_ref)

    # aggregate-then-transform: accumulate A_tile @ x_tile in f32.
    acc_ref[...] += jnp.dot(a_ref[...], x_ref[...],
                            preferred_element_type=jnp.float32)

    @pl.when(k == pl.num_programs(1) - 1)
    def _():
        agg = acc_ref[...].astype(jnp.bfloat16)                       # (TM, F_in)
        h = jnp.dot(agg, w1_ref[...],
                    preferred_element_type=jnp.float32) + b1_ref[...]
        h = jnp.maximum(h, 0.0)                                       # ReLU
        # TODO(synk): training-mode dropout would need pltpu.prng_seed +
        # pltpu.stateful_bernoulli; eval mode == identity (inference semantics).
        t_ref[...] = jnp.dot(h.astype(jnp.bfloat16), w2_ref[...],
                             preferred_element_type=jnp.float32
                             ).astype(t_ref.dtype)


def _gcn_layer2_kernel(a_ref, t_ref, b2_ref, out_ref, acc_ref, *, num_classes):
    """out = log_softmax(A @ t + b2) over the (masked, lane-padded) class axis."""
    k = pl.program_id(1)

    @pl.when(k == 0)
    def _():
        acc_ref[...] = jnp.zeros_like(acc_ref)

    acc_ref[...] += jnp.dot(a_ref[...], t_ref[...],
                            preferred_element_type=jnp.float32)

    @pl.when(k == pl.num_programs(1) - 1)
    def _():
        z = acc_ref[...] + b2_ref[...]                                # (TM, C_pad) f32
        col = jax.lax.broadcasted_iota(jnp.int32, z.shape, 1)
        valid = col < num_classes                                     # mask pad lanes
        zm = jnp.where(valid, z, -jnp.inf)
        m = jnp.max(zm, axis=1, keepdims=True)
        s = zm - m
        e = jnp.where(valid, jnp.exp(s), 0.0)
        lse = jnp.log(jnp.sum(e, axis=1, keepdims=True))
        out_ref[...] = jnp.where(valid, s - lse, 0.0)


# ------------------------------- JAX glue -------------------------------------
def build_normalized_adjacency(edge_index, num_nodes):
    """Dense A_hat = D^-1/2 (A + I) D^-1/2 from a [2, E] int edge_index (symmetrized)."""
    src, dst = edge_index[0], edge_index[1]
    a = jnp.zeros((num_nodes, num_nodes), jnp.float32)
    a = a.at[src, dst].set(1.0)
    a = a.at[dst, src].set(1.0)
    a = a + jnp.eye(num_nodes, dtype=jnp.float32)          # self-loops
    a = jnp.minimum(a, 1.0)                                # dedupe multi-edges
    deg = jnp.sum(a, axis=1)
    d_inv_sqrt = jnp.where(deg > 0, 1.0 / jnp.sqrt(deg), 0.0)
    return a * d_inv_sqrt[:, None] * d_inv_sqrt[None, :]


def gcn_forward(x, edge_index, w1, b1, w2, b2, *, tile=128):
    """Full GCNModel forward (eval mode). tile=128 suits v5e; 256 also works on v6e/v7x."""
    n, f_in = x.shape
    hidden = w1.shape[1]
    n_classes = w2.shape[1]

    n_pad = _round_up(n, tile)          # fill the MXU height / tile the row axis
    c_pad = _round_up(n_classes, LANE)  # lane-dense output stores

    a_hat = build_normalized_adjacency(edge_index, n)
    a_pad = jnp.zeros((n_pad, n_pad), jnp.float32).at[:n, :n].set(a_hat)
    x_pad = jnp.zeros((n_pad, f_in), jnp.float32).at[:n, :].set(x)
    w2_pad = jnp.zeros((hidden, c_pad), jnp.float32).at[:, :n_classes].set(w2)
    b2_pad = jnp.zeros((1, c_pad), jnp.float32).at[:, :n_classes].set(
        b2.reshape(1, n_classes))
    b1_f32 = b1.reshape(1, hidden).astype(jnp.float32)

    # bf16 operands (MXU fast path on v5e/v6e/v7x); accumulation stays f32 in-kernel.
    a_bf = a_pad.astype(jnp.bfloat16)
    x_bf = x_pad.astype(jnp.bfloat16)
    w1_bf = w1.astype(jnp.bfloat16)
    w2_bf = w2_pad.astype(jnp.bfloat16)

    grid = (n_pad // tile, n_pad // tile)
    cparams = pltpu.CompilerParams(
        dimension_semantics=("parallel", "arbitrary"),   # rows across TCs (v7x), K reduction
        vmem_limit_bytes=32 << 20,                       # safe on v7x's 64 MiB VMEM
    )

    # ---- kernel 1: t = relu((A @ x) @ W1 + b1) @ W2  (layer-2 transform fused) ----
    t = pl.pallas_call(
        _gcn_layer1_kernel,
        out_shape=jax.ShapeDtypeStruct((n_pad, c_pad), jnp.bfloat16),
        grid_spec=pltpu.PrefetchScalarGridSpec(
            num_scalar_prefetch=0,
            grid=grid,
            in_specs=[
                pl.BlockSpec((tile, tile), lambda i, k: (i, k)),      # A_hat tile
                pl.BlockSpec((tile, f_in), lambda i, k: (k, 0)),      # x column panel
                pl.BlockSpec((f_in, hidden), lambda i, k: (0, 0)),    # W1 (resident)
                pl.BlockSpec((1, hidden), lambda i, k: (0, 0)),       # b1
                pl.BlockSpec((hidden, c_pad), lambda i, k: (0, 0)),   # W2 (resident)
            ],
            out_specs=pl.BlockSpec((tile, c_pad), lambda i, k: (i, 0)),
            scratch_shapes=[pltpu.VMEM((tile, f_in), jnp.float32)],
        ),
        compiler_params=cparams,
    )(a_bf, x_bf, w1_bf, b1_f32, w2_bf)

    # ---- kernel 2: out = log_softmax(A @ t + b2) with masked padded class lanes ----
    out_pad = pl.pallas_call(
        functools.partial(_gcn_layer2_kernel, num_classes=n_classes),
        out_shape=jax.ShapeDtypeStruct((n_pad, c_pad), jnp.float32),
        grid_spec=pltpu.PrefetchScalarGridSpec(
            num_scalar_prefetch=0,
            grid=grid,
            in_specs=[
                pl.BlockSpec((tile, tile), lambda i, k: (i, k)),      # A_hat tile
                pl.BlockSpec((tile, c_pad), lambda i, k: (k, 0)),     # t panel
                pl.BlockSpec((1, c_pad), lambda i, k: (0, 0)),        # b2
            ],
            out_specs=pl.BlockSpec((tile, c_pad), lambda i, k: (i, 0)),
            scratch_shapes=[pltpu.VMEM((tile, c_pad), jnp.float32)],
        ),
        compiler_params=cparams,
    )(a_bf, t, b2_pad)

    return out_pad[:n, :n_classes]


def glorot(key, shape):
    fan_in, fan_out = shape
    limit = jnp.sqrt(6.0 / (fan_in + fan_out))
    return jax.random.uniform(key, shape, jnp.float32, -limit, limit)


# --------------------------------- main ---------------------------------------
if __name__ == "__main__":
    # Small shapes consistent with the module (hidden_channels=128 default).
    N_NODES = 200          # pads to 256 -> grid (2, 2): exercises tiling + reduction
    IN_CHANNELS = 16
    HIDDEN = 128
    OUT_CHANNELS = 8
    N_EDGES = 800

    key = jax.random.PRNGKey(0)
    k_x, k_e, k_w1, k_w2 = jax.random.split(key, 4)

    # data.x : node features, data.edge_index : [2, E] graph connectivity
    x = jax.random.normal(k_x, (N_NODES, IN_CHANNELS), jnp.float32)
    edge_index = jax.random.randint(k_e, (2, N_EDGES), 0, N_NODES, jnp.int32)

    # GCNConv params: weight (F_in, F_out), bias (F_out,)
    w1 = glorot(k_w1, (IN_CHANNELS, HIDDEN))
    b1 = jnp.zeros((1, HIDDEN), jnp.float32)
    w2 = glorot(k_w2, (HIDDEN, OUT_CHANNELS))
    b2 = jnp.zeros((1, OUT_CHANNELS), jnp.float32)

    fwd = jax.jit(gcn_forward)                      # A_hat build + both kernels fused in one jit
    out = jax.block_until_ready(fwd(x, edge_index, w1, b1, w2, b2))

    # ----- sanity checks -----
    assert out.shape == (N_NODES, OUT_CHANNELS)

    # log_softmax rows must sum to 1 after exp
    row_sums = jnp.exp(out).sum(axis=1)
    assert bool(jnp.all(jnp.abs(row_sums - 1.0) < 1e-3))

    # plain-JAX f32 reference (kernel uses bf16 operands + f32 accumulation)
    a_hat = build_normalized_adjacency(edge_index, N_NODES)
    h_ref = jnp.maximum(a_hat @ (x @ w1) + b1, 0.0)
    z_ref = a_hat @ (h_ref @ w2) + b2
    ref = jax.nn.log_softmax(z_ref, axis=1)
    assert bool(jnp.max(jnp.abs(out - ref)) < 5e-2)

    print("KERNEL_OK")
</pallas_src>

<mosaic_0001>
module attributes {stable_mosaic.version = 11 : i64} {
  func.func @_gcn_layer1_kernel(%arg0: i32, %arg1: i32, %arg2: memref<128x128xbf16, #tpu.memory_space<vmem>>, %arg3: memref<128x16xbf16, #tpu.memory_space<vmem>>, %arg4: memref<16x128xbf16, #tpu.memory_space<vmem>>, %arg5: memref<1x128xf32, #tpu.memory_space<vmem>>, %arg6: memref<128x128xbf16, #tpu.memory_space<vmem>>, %arg7: memref<128x128xbf16, #tpu.memory_space<vmem>>, %arg8: memref<128x16xf32, #tpu.memory_space<vmem>>) attributes {dimension_semantics = [#tpu.dimension_semantics<parallel>, #tpu.dimension_semantics<arbitrary>], iteration_bounds = array<i64: 2, 2>, scalar_prefetch = 0 : i64, scratch_operands = 1 : i64, tpu.core_type = #tpu.core_type<tc>, window_params = [{transform_indices = @transform_0, window_bounds = array<i64: 128, 128>}, {transform_indices = @transform_1, window_bounds = array<i64: 128, 16>}, {pipeline_mode = #tpu.pipeline_mode<synchronous>, transform_indices = @transform_2, window_bounds = array<i64: 16, 128>}, {pipeline_mode = #tpu.pipeline_mode<synchronous>, transform_indices = @transform_3, window_bounds = array<i64: 1, 128>}, {pipeline_mode = #tpu.pipeline_mode<synchronous>, transform_indices = @transform_4, window_bounds = array<i64: 128, 128>}, {transform_indices = @transform_5, window_bounds = array<i64: 128, 128>}]} {
    %c0_i32 = arith.constant 0 : i32
    %0 = arith.cmpi eq, %arg1, %c0_i32 : i32
    %1 = arith.extui %0 : i1 to i32
    %c0_i32_0 = arith.constant 0 : i32
    %2 = arith.cmpi ne, %1, %c0_i32_0 : i32
    scf.if %2 {
      %cst_9 = arith.constant 0.000000e+00 : f32
      %12 = vector.broadcast %cst_9 : f32 to vector<128x16xf32>
      %c0_10 = arith.constant 0 : index
      %c0_11 = arith.constant 0 : index
      %13 = vector.load %arg8[%c0_10, %c0_11] : memref<128x16xf32, #tpu.memory_space<vmem>>, vector<128x16xf32>
      tpu.vector_store %arg8[%c0_10, %c0_11], %12 {strides = array<i32>} : memref<128x16xf32, #tpu.memory_space<vmem>>, vector<128x16xf32>,
    } else {
    }
    %c0 = arith.constant 0 : index
    %c0_1 = arith.constant 0 : index
    %3 = vector.load %arg8[%c0, %c0_1] : memref<128x16xf32, #tpu.memory_space<vmem>>, vector<128x16xf32>
    %c0_2 = arith.constant 0 : index
    %c0_3 = arith.constant 0 : index
    %4 = vector.load %arg2[%c0_2, %c0_3] : memref<128x128xbf16, #tpu.memory_space<vmem>>, vector<128x128xbf16>
    %c0_4 = arith.constant 0 : index
    %c0_5 = arith.constant 0 : index
    %5 = vector.load %arg3[%c0_4, %c0_5] : memref<128x16xbf16, #tpu.memory_space<vmem>>, vector<128x16xbf16>
    %cst = arith.constant dense<0.000000e+00> : vector<128x16xf32>
    %6 = tpu.matmul %4, %5, %cst {dimension_numbers = #tpu.dot_dimension_numbers<[1], [0], [0], [1], [0, 0, 1, 1], [], []>} : vector<128x128xbf16>, vector<128x16xbf16>, vector<128x16xf32> -> vector<128x16xf32>
    %7 = arith.addf %3, %6 : vector<128x16xf32>
    %c0_6 = arith.constant 0 : index
    %c0_7 = arith.constant 0 : index
    %8 = vector.load %arg8[%c0_6, %c0_7] : memref<128x16xf32, #tpu.memory_space<vmem>>, vector<128x16xf32>
    tpu.vector_store %arg8[%c0_6, %c0_7], %7 {strides = array<i32>} : memref<128x16xf32, #tpu.memory_space<vmem>>, vector<128x16xf32>,
    %c1_i32 = arith.constant 1 : i32
    %9 = arith.cmpi eq, %arg1, %c1_i32 : i32
    %10 = arith.extui %9 : i1 to i32
    %c0_i32_8 = arith.constant 0 : i32
    %11 = arith.cmpi ne, %10, %c0_i32_8 : i32
    scf.if %11 {
      %c0_9 = arith.constant 0 : index
      %c0_10 = arith.constant 0 : index
      %12 = vector.load %arg8[%c0_9, %c0_10] : memref<128x16xf32, #tpu.memory_space<vmem>>, vector<128x16xf32>
      %13 = arith.truncf %12 : vector<128x16xf32> to vector<128x16xbf16>
      %c0_11 = arith.constant 0 : index
      %c0_12 = arith.constant 0 : index
      %14 = vector.load %arg4[%c0_11, %c0_12] : memref<16x128xbf16, #tpu.memory_space<vmem>>, vector<16x128xbf16>
      %cst_13 = arith.constant dense<0.000000e+00> : vector<128x128xf32>
      %15 = tpu.matmul %13, %14, %cst_13 {dimension_numbers = #tpu.dot_dimension_numbers<[1], [0], [0], [1], [0, 0, 1, 1], [], []>} : vector<128x16xbf16>, vector<16x128xbf16>, vector<128x128xf32> -> vector<128x128xf32>
      %c0_14 = arith.constant 0 : index
      %c0_15 = arith.constant 0 : index
      %16 = vector.load %arg5[%c0_14, %c0_15] : memref<1x128xf32, #tpu.memory_space<vmem>>, vector<1x128xf32>
      %17 = vector.broadcast %16 : vector<1x128xf32> to vector<128x128xf32>
      %18 = arith.addf %15, %17 : vector<128x128xf32>
      %cst_16 = arith.constant 0.000000e+00 : f32
      %19 = vector.broadcast %cst_16 : f32 to vector<128x128xf32>
      %20 = arith.maximumf %18, %19 : vector<128x128xf32>
      %21 = arith.truncf %20 : vector<128x128xf32> to vector<128x128xbf16>
      %c0_17 = arith.constant 0 : index
      %c0_18 = arith.constant 0 : index
      %22 = vector.load %arg6[%c0_17, %c0_18] : memref<128x128xbf16, #tpu.memory_space<vmem>>, vector<128x128xbf16>
      %cst_19 = arith.constant dense<0.000000e+00> : vector<128x128xf32>
      %23 = tpu.matmul %21, %22, %cst_19 {dimension_numbers = #tpu.dot_dimension_numbers<[1], [0], [0], [1], [0, 0, 1, 1], [], []>} : vector<128x128xbf16>, vector<128x128xbf16>, vector<128x128xf32> -> vector<128x128xf32>
      %24 = arith.truncf %23 : vector<128x128xf32> to vector<128x128xbf16>
      %c0_20 = arith.constant 0 : index
      %c0_21 = arith.constant 0 : index
      %25 = vector.load %arg7[%c0_20, %c0_21] : memref<128x128xbf16, #tpu.memory_space<vmem>>, vector<128x128xbf16>
      tpu.vector_store %arg7[%c0_20, %c0_21], %24 {strides = array<i32>} : memref<128x128xbf16, #tpu.memory_space<vmem>>, vector<128x128xbf16>,
    } else {
    }
    return
  }
  func.func @transform_0(%arg0: i32, %arg1: i32) -> (i32, i32) {
    %c0_i32 = arith.constant 0 : i32
    return %arg0, %arg1 : i32, i32
  }
  func.func @transform_1(%arg0: i32, %arg1: i32) -> (i32, i32) {
    %c0_i32 = arith.constant 0 : i32
    %c0_i32_0 = arith.constant 0 : i32
    return %arg1, %c0_i32 : i32, i32
  }
  func.func @transform_2(%arg0: i32, %arg1: i32) -> (i32, i32) {
    %c0_i32 = arith.constant 0 : i32
    %c0_i32_0 = arith.constant 0 : i32
    %c0_i32_1 = arith.constant 0 : i32
    return %c0_i32, %c0_i32_0 : i32, i32
  }
  func.func @transform_3(%arg0: i32, %arg1: i32) -> (i32, i32) {
    %c0_i32 = arith.constant 0 : i32
    %c0_i32_0 = arith.constant 0 : i32
    %c0_i32_1 = arith.constant 0 : i32
    return %c0_i32, %c0_i32_0 : i32, i32
  }
  func.func @transform_4(%arg0: i32, %arg1: i32) -> (i32, i32) {
    %c0_i32 = arith.constant 0 : i32
    %c0_i32_0 = arith.constant 0 : i32
    %c0_i32_1 = arith.constant 0 : i32
    return %c0_i32, %c0_i32_0 : i32, i32
  }
  func.func @transform_5(%arg0: i32, %arg1: i32) -> (i32, i32) {
    %c0_i32 = arith.constant 0 : i32
    %c0_i32_0 = arith.constant 0 : i32
    return %arg0, %c0_i32 : i32, i32
  }
}

module attributes {stable_mosaic.version = 11 : i64} {
  func.func @_gcn_layer2_kernel(%arg0: i32, %arg1: i32, %arg2: memref<128x128xbf16, #tpu.memory_space<vmem>>, %arg3: memref<128x128xbf16, #tpu.memory_space<vmem>>, %arg4: memref<1x128xf32, #tpu.memory_space<vmem>>, %arg5: memref<128x128xf32, #tpu.memory_space<vmem>>, %arg6: memref<128x128xf32, #tpu.memory_space<vmem>>) attributes {dimension_semantics = [#tpu.dimension_semantics<parallel>, #tpu.dimension_semantics<arbitrary>], iteration_bounds = array<i64: 2, 2>, scalar_prefetch = 0 : i64, scratch_operands = 1 : i64, tpu.core_type = #tpu.core_type<tc>, window_params = [{transform_indices = @transform_0, window_bounds = array<i64: 128, 128>}, {transform_indices = @transform_1, window_bounds = array<i64: 128, 128>}, {pipeline_mode = #tpu.pipeline_mode<synchronous>, transform_indices = @transform_2, window_bounds = array<i64: 1, 128>}, {transform_indices = @transform_3, window_bounds = array<i64: 128, 128>}]} {
    %c0_i32 = arith.constant 0 : i32
    %0 = arith.cmpi eq, %arg1, %c0_i32 : i32
    %1 = arith.extui %0 : i1 to i32
    %c0_i32_0 = arith.constant 0 : i32
    %2 = arith.cmpi ne, %1, %c0_i32_0 : i32
    scf.if %2 {
      %cst_9 = arith.constant 0.000000e+00 : f32
      %12 = vector.broadcast %cst_9 : f32 to vector<128x128xf32>
      %c0_10 = arith.constant 0 : index
      %c0_11 = arith.constant 0 : index
      %13 = vector.load %arg6[%c0_10, %c0_11] : memref<128x128xf32, #tpu.memory_space<vmem>>, vector<128x128xf32>
      tpu.vector_store %arg6[%c0_10, %c0_11], %12 {strides = array<i32>} : memref<128x128xf32, #tpu.memory_space<vmem>>, vector<128x128xf32>,
    } else {
    }
    %c0 = arith.constant 0 : index
    %c0_1 = arith.constant 0 : index
    %3 = vector.load %arg6[%c0, %c0_1] : memref<128x128xf32, #tpu.memory_space<vmem>>, vector<128x128xf32>
    %c0_2 = arith.constant 0 : index
    %c0_3 = arith.constant 0 : index
    %4 = vector.load %arg2[%c0_2, %c0_3] : memref<128x128xbf16, #tpu.memory_space<vmem>>, vector<128x128xbf16>
    %c0_4 = arith.constant 0 : index
    %c0_5 = arith.constant 0 : index
    %5 = vector.load %arg3[%c0_4, %c0_5] : memref<128x128xbf16, #tpu.memory_space<vmem>>, vector<128x128xbf16>
    %cst = arith.constant dense<0.000000e+00> : vector<128x128xf32>
    %6 = tpu.matmul %4, %5, %cst {dimension_numbers = #tpu.dot_dimension_numbers<[1], [0], [0], [1], [0, 0, 1, 1], [], []>} : vector<128x128xbf16>, vector<128x128xbf16>, vector<128x128xf32> -> vector<128x128xf32>
    %7 = arith.addf %3, %6 : vector<128x128xf32>
    %c0_6 = arith.constant 0 : index
    %c0_7 = arith.constant 0 : index
    %8 = vector.load %arg6[%c0_6, %c0_7] : memref<128x128xf32, #tpu.memory_space<vmem>>, vector<128x128xf32>
    tpu.vector_store %arg6[%c0_6, %c0_7], %7 {strides = array<i32>} : memref<128x128xf32, #tpu.memory_space<vmem>>, vector<128x128xf32>,
    %c1_i32 = arith.constant 1 : i32
    %9 = arith.cmpi eq, %arg1, %c1_i32 : i32
    %10 = arith.extui %9 : i1 to i32
    %c0_i32_8 = arith.constant 0 : i32
    %11 = arith.cmpi ne, %10, %c0_i32_8 : i32
    scf.if %11 {
      %c0_9 = arith.constant 0 : index
      %c0_10 = arith.constant 0 : index
      %12 = vector.load %arg6[%c0_9, %c0_10] : memref<128x128xf32, #tpu.memory_space<vmem>>, vector<128x128xf32>
      %c0_11 = arith.constant 0 : index
      %c0_12 = arith.constant 0 : index
      %13 = vector.load %arg4[%c0_11, %c0_12] : memref<1x128xf32, #tpu.memory_space<vmem>>, vector<1x128xf32>
      %14 = vector.broadcast %13 : vector<1x128xf32> to vector<128x128xf32>
      %15 = arith.addf %12, %14 : vector<128x128xf32>
      %16 = tpu.iota {dimensions = array<i32: 1>} : vector<128x128xi32>
      %c8_i32 = arith.constant 8 : i32
      %17 = vector.broadcast %c8_i32 : i32 to vector<128x128xi32>
      %18 = arith.cmpi slt, %16, %17 : vector<128x128xi32>
      %cst_13 = arith.constant 0xFF800000 : f32
      %19 = vector.broadcast %cst_13 : f32 to vector<128x128xf32>
      %20 = arith.select %18, %15, %19 : vector<128x128xi1>, vector<128x128xf32>
      %cst_14 = arith.constant dense<0xFF800000> : vector<128xf32>
      %21 = vector.multi_reduction <maximumf>, %20, %cst_14 [1] : vector<128x128xf32> to vector<128xf32>
      %22 = vector.shape_cast %21 : vector<128xf32> to vector<128x1xf32>
      %23 = vector.broadcast %22 : vector<128x1xf32> to vector<128x128xf32>
      %24 = arith.subf %20, %23 : vector<128x128xf32>
      %25 = math.exp %24 : vector<128x128xf32>
      %cst_15 = arith.constant 0.000000e+00 : f32
      %26 = vector.broadcast %cst_15 : f32 to vector<128x128xf32>
      %27 = arith.select %18, %25, %26 : vector<128x128xi1>, vector<128x128xf32>
      %cst_16 = arith.constant dense<0.000000e+00> : vector<128xf32>
      %28 = vector.multi_reduction <add>, %27, %cst_16 [1] : vector<128x128xf32> to vector<128xf32>
      %29 = vector.shape_cast %28 : vector<128xf32> to vector<128x1xf32>
      %30 = math.log %29 : vector<128x1xf32>
      %31 = vector.broadcast %30 : vector<128x1xf32> to vector<128x128xf32>
      %32 = arith.subf %24, %31 : vector<128x128xf32>
      %cst_17 = arith.constant 0.000000e+00 : f32
      %33 = vector.broadcast %cst_17 : f32 to vector<128x128xf32>
      %34 = arith.select %18, %32, %33 : vector<128x128xi1>, vector<128x128xf32>
      %c0_18 = arith.constant 0 : index
      %c0_19 = arith.constant 0 : index
      %35 = vector.load %arg5[%c0_18, %c0_19] : memref<128x128xf32, #tpu.memory_space<vmem>>, vector<128x128xf32>
      tpu.vector_store %arg5[%c0_18, %c0_19], %34 {strides = array<i32>} : memref<128x128xf32, #tpu.memory_space<vmem>>, vector<128x128xf32>,
    } else {
    }
    return
  }
  func.func @transform_0(%arg0: i32, %arg1: i32) -> (i32, i32) {
    %c0_i32 = arith.constant 0 : i32
    return %arg0, %arg1 : i32, i32
  }
  func.func @transform_1(%arg0: i32, %arg1: i32) -> (i32, i32) {
    %c0_i32 = arith.constant 0 : i32
    %c0_i32_0 = arith.constant 0 : i32
    return %arg1, %c0_i32 : i32, i32
  }
  func.func @transform_2(%arg0: i32, %arg1: i32) -> (i32, i32) {
    %c0_i32 = arith.constant 0 : i32
    %c0_i32_0 = arith.constant 0 : i32
    %c0_i32_1 = arith.constant 0 : i32
    return %c0_i32, %c0_i32_0 : i32, i32
  }
  func.func @transform_3(%arg0: i32, %arg1: i32) -> (i32, i32) {
    %c0_i32 = arith.constant 0 : i32
    %c0_i32_0 = arith.constant 0 : i32
    return %arg0, %c0_i32 : i32, i32
  }
}

</mosaic_0001>

<llo_original>
// kernel: gcn_forward.2
$region0: #{gcn_forward.2}
  #allocation0 [shape = 'u32[]', space=smem, size = 0x4, offset = 0x4, fixed_abs, tag = 'smem constant byte address 0x4 - core index']
  #allocation1 [shape = 'u32[144,128]{1,0:T(1,128)}', space=vmem, size = 0x12000, scoped, tag = 'internal scratch']
  #allocation2 [shape = 'f32[128,16]{1,0:T(8,128)}', space=vmem, size = 0x10000, scoped, tag = 'scratch operand']
  %s0 = inlined_call_operand.vmem [shape: bf16[256,256], index: 0, kind: input, shape index: {}]
  %s1 = inlined_call_operand.vmem [shape: bf16[256,16], index: 1, kind: input, shape index: {}]
  %s2 = inlined_call_operand.vmem [shape: bf16[16,128], index: 2, kind: input, shape index: {}]
  %s3 = inlined_call_operand.vmem [shape: f32[1,128], index: 3, kind: input, shape index: {}]
  %s4 = inlined_call_operand.vmem [shape: bf16[128,128], index: 4, kind: input, shape index: {}]
  %s5 = inlined_call_operand.vmem [shape: bf16[256,128], index: 5, kind: output, shape index: {}]
  %s6 = sld [smem:[#allocation0]]
  $region102: #{gcn_forward.2} parent=0
    _
  %s8 = ssub.s32 1, %s6
  %s9 = scalar_select 0, %s8, %s6
  $region1: #{gcn_forward.2} parent=0
    #allocation3 [shape = 'u8[65536]{0}', space=vmem, size = 0x10000, scoped, tag = 'input window, operand 0']
    loop: start=0, step=1, limit=6
    $region2: #{gcn_forward.2} parent=1 // loop_pre_header
      _
    $region3: #{gcn_forward.2} parent=1 // loop_header
      %s11 = sphi 0, %s15
      %p12 = scmp.ge.s32.totalorder %s11, 6
      %s18 = sphi 0, %s30
      %s19 = sphi 0, %s26
      %s20 = sphi 0, %s18
      %s21 = sphi 0, %s19
      %s22 = sphi 0, %s20
      %s23 = sphi 0, %s21
      %s35 = sphi 0, %s37
      %s38 = sphi 0, %s35
      %s39 = sphi 0, %s38
      %s55 = sphi 0, %s39
      %s61 = sphi 0, %s63
      %s64 = sphi 0, %s61
      %s65 = sphi 0, %s64
      %s81 = sphi 0, %s65
      %s85 = sphi 0, %s85
      %s87 = sphi 0, %s85
      %s88 = sphi 0, %s87
      %s102 = sphi 0, %s88
      %s106 = sphi 0, %s106
      %s108 = sphi 0, %s106
      %s109 = sphi 0, %s108
      %s123 = sphi 0, %s109
      %s127 = sphi 0, %s127
      %s129 = sphi 0, %s127
      %s130 = sphi 0, %s129
      %s144 = sphi 0, %s130
      %s150 = sphi 0, %s152
      %s153 = sphi 0, %s150
      %s154 = sphi 0, %s153
      %s170 = sphi 0, %s154
    $region4: #{gcn_forward.2} parent=1 // loop_header_branch
      %14 = sbr.rel (%p12) target = $region8
    $region5: #{gcn_forward.2} parent=1 // loop_body
      %s16 = ssub.s32 %s11, 1
      %s17 = ssub.s32 %s11, 2
      %s24 = sadd.s32 1, %s19
      %p25 = scmp.ge.s32.totalorder %s24, 2
      %s26 = scalar_select %p25, 0, %s24
      %s27 = sadd.s32 1, %s18
      %s28 = scalar_select %p25, %s27, %s18
      %p29 = scmp.ge.s32.totalorder %s28, 2
      %s30 = scalar_select %p29, 0, %s28
      %s31 = ssub.s32 %s18, %s30
      %s32 = ssub.s32 %s19, %s26
      %s33 = sor.u32 %s31, %s32
      %p34 = scmp.eq.s32.totalorder %s33, 0
      %s36 = sadd.s32 %s35, 1
      %s37 = scalar_select %p34, %s35, %s36
      %p40 = pneg %p34
      %p41 = scmp.eq.s32.totalorder %s11, 3
      %p42 = por %p40, %p41
      %p43 = scmp.ne.s32.totalorder %s35, %s38
      %p44 = scmp.eq.s32.totalorder %s11, 0
      %p45 = por %p43, %p44
      %p46 = scmp.ne.s32.totalorder %s35, %s38
      %p47 = scmp.eq.s32.totalorder %s16, 3
      %p48 = por %p46, %p47
      %p49 = scmp.ne.s32.totalorder %s38, %s39
      %p50 = scmp.eq.s32.totalorder %s16, 0
      %p51 = por %p49, %p50
      %p52 = scmp.ne.s32.totalorder %s38, %s39
      %p53 = scmp.eq.s32.totalorder %s17, 3
      %p54 = por %p52, %p53
      %p56 = scmp.ne.s32.totalorder %s39, %s55
      %p57 = scmp.eq.s32.totalorder %s17, 0
      %p58 = por %p56, %p57
      %s59 = ssub.s32 %s19, %s26
      %p60 = scmp.eq.s32.totalorder %s59, 0
      %s62 = sadd.s32 %s61, 1
      %s63 = scalar_select %p60, %s61, %s62
      %p66 = pneg %p60
      %p67 = scmp.eq.s32.totalorder %s11, 3
      %p68 = por %p66, %p67
      %p69 = scmp.ne.s32.totalorder %s61, %s64
      %p70 = scmp.eq.s32.totalorder %s11, 0
      %p71 = por %p69, %p70
      %p72 = scmp.ne.s32.totalorder %s61, %s64
      %p73 = scmp.eq.s32.totalorder %s16, 3
      %p74 = por %p72, %p73
      %p75 = scmp.ne.s32.totalorder %s64, %s65
      %p76 = scmp.eq.s32.totalorder %s16, 0
      %p77 = por %p75, %p76
      %p78 = scmp.ne.s32.totalorder %s64, %s65
      %p79 = scmp.eq.s32.totalorder %s17, 3
      %p80 = por %p78, %p79
      %p82 = scmp.ne.s32.totalorder %s65, %s81
      %p83 = scmp.eq.s32.totalorder %s17, 0
      %p84 = por %p82, %p83
      %s86 = sadd.s32 %s85, 1
      %p89 = scmp.eq.s32.totalorder %s11, 3
      %p90 = scmp.ne.s32.totalorder %s85, %s87
      %p91 = scmp.eq.s32.totalorder %s11, 0
      %p92 = por %p90, %p91
      %p93 = scmp.ne.s32.totalorder %s85, %s87
      %p94 = scmp.eq.s32.totalorder %s16, 3
      %p95 = por %p93, %p94
      %p96 = scmp.ne.s32.totalorder %s87, %s88
      %p97 = scmp.eq.s32.totalorder %s16, 0
      %p98 = por %p96, %p97
      %p99 = scmp.ne.s32.totalorder %s87, %s88
      %p100 = scmp.eq.s32.totalorder %s17, 3
      %p101 = por %p99, %p100
      %p103 = scmp.ne.s32.totalorder %s88, %s102
      %p104 = scmp.eq.s32.totalorder %s17, 0
      %p105 = por %p103, %p104
      %s107 = sadd.s32 %s106, 1
      %p110 = scmp.eq.s32.totalorder %s11, 3
      %p111 = scmp.ne.s32.totalorder %s106, %s108
      %p112 = scmp.eq.s32.totalorder %s11, 0
      %p113 = por %p111, %p112
      %p114 = scmp.ne.s32.totalorder %s106, %s108
      %p115 = scmp.eq.s32.totalorder %s16, 3
      %p116 = por %p114, %p115
      %p117 = scmp.ne.s32.totalorder %s108, %s109
      %p118 = scmp.eq.s32.totalorder %s16, 0
      %p119 = por %p117, %p118
      %p120 = scmp.ne.s32.totalorder %s108, %s109
      %p121 = scmp.eq.s32.totalorder %s17, 3
      %p122 = por %p120, %p121
      %p124 = scmp.ne.s32.totalorder %s109, %s123
      %p125 = scmp.eq.s32.totalorder %s17, 0
      %p126 = por %p124, %p125
      %s128 = sadd.s32 %s127, 1
      %p131 = scmp.eq.s32.totalorder %s11, 3
      %p132 = scmp.ne.s32.totalorder %s127, %s129
      %p133 = scmp.eq.s32.totalorder %s11, 0
      %p134 = por %p132, %p133
      %p135 = scmp.ne.s32.totalorder %s127, %s129
      %p136 = scmp.eq.s32.totalorder %s16, 3
      %p137 = por %p135, %p136
      %p138 = scmp.ne.s32.totalorder %s129, %s130
      %p139 = scmp.eq.s32.totalorder %s16, 0
      %p140 = por %p138, %p139
      %p141 = scmp.ne.s32.totalorder %s129, %s130
      %p142 = scmp.eq.s32.totalorder %s17, 3
      %p143 = por %p141, %p142
      %p145 = scmp.ne.s32.totalorder %s130, %s144
      %p146 = scmp.eq.s32.totalorder %s17, 0
      %p147 = por %p145, %p146
      %s148 = ssub.s32 %s18, %s30
      %p149 = scmp.eq.s32.totalorder %s148, 0
      %s151 = sadd.s32 %s150, 1
      %s152 = scalar_select %p149, %s150, %s151
      %p155 = pneg %p149
      %p156 = scmp.eq.s32.totalorder %s11, 3
      %p157 = por %p155, %p156
      %p158 = scmp.ne.s32.totalorder %s150, %s153
      %p159 = scmp.eq.s32.totalorder %s11, 0
      %p160 = por %p158, %p159
      %p161 = scmp.ne.s32.totalorder %s150, %s153
      %p162 = scmp.eq.s32.totalorder %s16, 3
      %p163 = por %p161, %p162
      %p164 = scmp.ne.s32.totalorder %s153, %s154
      %p165 = scmp.eq.s32.totalorder %s16, 0
      %p166 = por %p164, %p165
      %p167 = scmp.ne.s32.totalorder %s153, %s154
      %p168 = scmp.eq.s32.totalorder %s17, 3
      %p169 = por %p167, %p168
      %p171 = scmp.ne.s32.totalorder %s154, %s170
      %p172 = scmp.eq.s32.totalorder %s17, 0
      %p173 = por %p171, %p172
      %p174 = scmp.le.s32.totalorder 1, %s11
      %p175 = scmp.lt.s32.totalorder %s11, 5
      %p176 = pnand %p174, %p175
      %p177 = pneg %p176
      // Predicated region
      $region9: #{gcn_forward.2} parent=5 // pred_check
        _
      $region10: #{gcn_forward.2} parent=5 // pred_check_branch
        %179 = sbr.rel (%p176) target = $region12
      $region11: #{gcn_forward.2} parent=5 // pred_region
        %s180 = ssub.s32 %s11, 1
        // Predicated region
        $region13: #{gcn_forward.2} parent=11 // pred_check
          %p181 = pneg %p98
        $region14: #{gcn_forward.2} parent=11 // pred_check_branch
          %183 = sbr.rel (%p181) target = $region16
        $region15: #{gcn_forward.2} parent=11 // pred_region
          _
        $region16: #{gcn_forward.2} parent=11 // pred_fallthru
          _
        // Predicated region
        $region17: #{gcn_forward.2} parent=11 // pred_check
          %p184 = pneg %p119
        $region18: #{gcn_forward.2} parent=11 // pred_check_branch
          %186 = sbr.rel (%p184) target = $region20
        $region19: #{gcn_forward.2} parent=11 // pred_region
          _
        $region20: #{gcn_forward.2} parent=11 // pred_fallthru
          _
        // Predicated region
        $region21: #{gcn_forward.2} parent=11 // pred_check
          %p187 = pneg %p140
        $region22: #{gcn_forward.2} parent=11 // pred_check_branch
          %189 = sbr.rel (%p187) target = $region24
        $region23: #{gcn_forward.2} parent=11 // pred_region
          _
        $region24: #{gcn_forward.2} parent=11 // pred_fallthru
          _
      $region12: #{gcn_forward.2} parent=5 // pred_fallthru
        _
      %p190 = scmp.lt.s32.totalorder %s11, 4
      // Predicated region
      $region25: #{gcn_forward.2} parent=5 // pred_check
        %p191 = pneg %p190
      $region26: #{gcn_forward.2} parent=5 // pred_check_branch
        %193 = sbr.rel (%p191) target = $region28
      $region27: #{gcn_forward.2} parent=5 // pred_region
        // Predicated region
        $region29: #{gcn_forward.2} parent=27 // pred_check
          %p194 = pneg %p45
        $region30: #{gcn_forward.2} parent=27 // pred_check_branch
          %196 = sbr.rel (%p194) target = $region32
        $region31: #{gcn_forward.2} parent=27 // pred_region
          %s197 = sand.u32 %s35, 1
          %s198 = sand.u32 %s35, 1
          %s199 = smul.addr %s198, 64
          %s200 = scalar_lea.vmem [#allocation3], %s199
          %s201 = smul.u32 16, %s18
          %s202 = smul.addr %s201, 2
          %s203 = sadd.s32 %s19, %s202
          %s204 = smul.addr %s203, 4
          %s205 = scalar_lea.vmem %s0, %s204
          // Predicated region
          $region33: #{gcn_forward.2} parent=31 // pred_check
            _
          $region34: #{gcn_forward.2} parent=31 // pred_check_branch
            %207 = sbr.rel (0) target = $region36
          $region35: #{gcn_forward.2} parent=31 // pred_region
            // Predicated region
            $region37: #{gcn_forward.2} parent=35 // pred_check
              _
            $region38: #{gcn_forward.2} parent=35 // pred_check_branch
              %209 = sbr.rel target = $region40
            $region39: #{gcn_forward.2} parent=35 // pred_region
              // Predicated region
              $region52: #{gcn_forward.2} parent=39 // pred_check
                _
              $region53: #{gcn_forward.2} parent=39 // pred_check_branch
                %254 = sbr.rel (0) target = $region55
              $region54: #{gcn_forward.2} parent=39 // pred_region
                loop: start=0, step=1, limit=1
                $region56: #{gcn_forward.2} parent=54 // loop_pre_header
                  _
                $region57: #{gcn_forward.2} parent=54 // loop_header
                  %s256 = sphi 0, %s260
                  %p257 = scmp.ge.s32.totalorder %s256, 1
                  %s261 = sphi %s205, %s205
                  %s262 = sphi %s200, %s200
                $region58: #{gcn_forward.2} parent=54 // loop_header_branch
                  %259 = sbr.rel (%p257) target = $region62
                $region59: #{gcn_forward.2} parent=54 // loop_body
                  _
                $region60: #{gcn_forward.2} parent=54 // loop_footer
                  %s260 = sadd.s32 1, %s256
                $region61: #{gcn_forward.2} parent=54 // loop_footer_branch
                  %255 = sbr.rel target = $region57
                $region62: #{gcn_forward.2} parent=54 // loop_exit
                  _
                loop: start=0, step=1, limit=1
                $region63: #{gcn_forward.2} parent=54 // loop_pre_header
                  _
                $region64: #{gcn_forward.2} parent=54 // loop_header
                  %s265 = sphi 0, %s269
                  %p266 = scmp.ge.s32.totalorder %s265, 1
                  %s270 = sphi %s205, %s205
                  %s271 = sphi %s200, %s200
                $region65: #{gcn_forward.2} parent=54 // loop_header_branch
                  %268 = sbr.rel (%p266) target = $region69
                $region66: #{gcn_forward.2} parent=54 // loop_body
                  %v272 = vld [vmem:[%s270] sm:$0xf]
                  %273 = vst [vmem:[%s271] sm:$0xf] %v272
                  %v274 = vld [vmem:[%s270 + $0x8] sm:$0xf]
                  %275 = vst [vmem:[%s271 + $0x4] sm:$0xf] %v274
                  %v276 = vld [vmem:[%s270 + $0x10] sm:$0xf]
                  %277 = vst [vmem:[%s271 + $0x8] sm:$0xf] %v276
                  %v278 = vld [vmem:[%s270 + $0x18] sm:$0xf]
                  %279 = vst [vmem:[%s271 + $0xc] sm:$0xf] %v278
                  %v280 = vld [vmem:[%s270 + $0x20] sm:$0xf]
                  %281 = vst [vmem:[%s271 + $0x10] sm:$0xf] %v280
                  %v282 = vld [vmem:[%s270 + $0x28] sm:$0xf]
                  %283 = vst [vmem:[%s271 + $0x14] sm:$0xf] %v282
                  %v284 = vld [vmem:[%s270 + $0x30] sm:$0xf]
                  %285 = vst [vmem:[%s271 + $0x18] sm:$0xf] %v284
                  %v286 = vld [vmem:[%s270 + $0x38] sm:$0xf]
                  %287 = vst [vmem:[%s271 + $0x1c] sm:$0xf] %v286
                  %v288 = vld [vmem:[%s270 + $0x40] sm:$0xf]
                  %289 = vst [vmem:[%s271 + $0x20] sm:$0xf] %v288
                  %v290 = vld [vmem:[%s270 + $0x48] sm:$0xf]
                  %291 = vst [vmem:[%s271 + $0x24] sm:$0xf] %v290
                  %v292 = vld [vmem:[%s270 + $0x50] sm:$0xf]
                  %293 = vst [vmem:[%s271 + $0x28] sm:$0xf] %v292
                  %v294 = vld [vmem:[%s270 + $0x58] sm:$0xf]
                  %295 = vst [vmem:[%s271 + $0x2c] sm:$0xf] %v294
                  %v296 = vld [vmem:[%s270 + $0x60] sm:$0xf]
                  %297 = vst [vmem:[%s271 + $0x30] sm:$0xf] %v296
                  %v298 = vld [vmem:[%s270 + $0x68] sm:$0xf]
                  %299 = vst [vmem:[%s271 + $0x34] sm:$0xf] %v298
                  %v300 = vld [vmem:[%s270 + $0x70] sm:$0xf]
                  %301 = vst [vmem:[%s271 + $0x38] sm:$0xf] %v300
                  %v302 = vld [vmem:[%s270 + $0x78] sm:$0xf]
                  %303 = vst [vmem:[%s271 + $0x3c] sm:$0xf] %v302
                $region67: #{gcn_forward.2} parent=54 // loop_footer
                  %s269 = sadd.s32 1, %s265
                $region68: #{gcn_forward.2} parent=54 // loop_footer_branch
                  %264 = sbr.rel target = $region64
                $region69: #{gcn_forward.2} parent=54 // loop_exit
                  _
              $region55: #{gcn_forward.2} parent=39 // pred_fallthru
                _
            $region40: #{gcn_forward.2} parent=35 // pred_fallthru
              _
            // Predicated region
            $region41: #{gcn_forward.2} parent=35 // pred_check
              _
            $region42: #{gcn_forward.2} parent=35 // pred_check_branch
              %211 = sbr.rel (0) target = $region44
            $region43: #{gcn_forward.2} parent=35 // pred_region
              loop: start=0, step=1, limit=1
              $region45: #{gcn_forward.2} parent=43 // loop_pre_header
                _
              $region46: #{gcn_forward.2} parent=43 // loop_header
                %s214 = sphi 0, %s218
                %p215 = scmp.ge.s32.totalorder %s214, 1
                %s219 = sphi %s205, %s205
                %s220 = sphi %s200, %s200
              $region47: #{gcn_forward.2} parent=43 // loop_header_branch
                %217 = sbr.rel (%p215) target = $region51
              $region48: #{gcn_forward.2} parent=43 // loop_body
                %v221 = vld [vmem:[%s219] sm:$0xf]
                %222 = vst [vmem:[%s220] sm:$0xf] %v221
                %v223 = vld [vmem:[%s219 + $0x8] sm:$0xf]
                %224 = vst [vmem:[%s220 + $0x4] sm:$0xf] %v223
                %v225 = vld [vmem:[%s219 + $0x10] sm:$0xf]
                %226 = vst [vmem:[%s220 + $0x8] sm:$0xf] %v225
                %v227 = vld [vmem:[%s219 + $0x18] sm:$0xf]
                %228 = vst [vmem:[%s220 + $0xc] sm:$0xf] %v227
                %v229 = vld [vmem:[%s219 + $0x20] sm:$0xf]
                %230 = vst [vmem:[%s220 + $0x10] sm:$0xf] %v229
                %v231 = vld [vmem:[%s219 + $0x28] sm:$0xf]
                %232 = vst [vmem:[%s220 + $0x14] sm:$0xf] %v231
                %v233 = vld [vmem:[%s219 + $0x30] sm:$0xf]
                %234 = vst [vmem:[%s220 + $0x18] sm:$0xf] %v233
                %v235 = vld [vmem:[%s219 + $0x38] sm:$0xf]
                %236 = vst [vmem:[%s220 + $0x1c] sm:$0xf] %v235
                %v237 = vld [vmem:[%s219 + $0x40] sm:$0xf]
                %238 = vst [vmem:[%s220 + $0x20] sm:$0xf] %v237
                %v239 = vld [vmem:[%s219 + $0x48] sm:$0xf]
                %240 = vst [vmem:[%s220 + $0x24] sm:$0xf] %v239
                %v241 = vld [vmem:[%s219 + $0x50] sm:$0xf]
                %242 = vst [vmem:[%s220 + $0x28] sm:$0xf] %v241
                %v243 = vld [vmem:[%s219 + $0x58] sm:$0xf]
                %244 = vst [vmem:[%s220 + $0x2c] sm:$0xf] %v243
                %v245 = vld [vmem:[%s219 + $0x60] sm:$0xf]
                %246 = vst [vmem:[%s220 + $0x30] sm:$0xf] %v245
                %v247 = vld [vmem:[%s219 + $0x68] sm:$0xf]
                %248 = vst [vmem:[%s220 + $0x34] sm:$0xf] %v247
                %v249 = vld [vmem:[%s219 + $0x70] sm:$0xf]
                %250 = vst [vmem:[%s220 + $0x38] sm:$0xf] %v249
                %v251 = vld [vmem:[%s219 + $0x78] sm:$0xf]
                %252 = vst [vmem:[%s220 + $0x3c] sm:$0xf] %v251
              $region49: #{gcn_forward.2} parent=43 // loop_footer
                %s218 = sadd.s32 1, %s214
              $region50: #{gcn_forward.2} parent=43 // loop_footer_branch
                %213 = sbr.rel target = $region46
              $region51: #{gcn_forward.2} parent=43 // loop_exit
                _
            $region44: #{gcn_forward.2} parent=35 // pred_fallthru
              _
          $region36: #{gcn_forward.2} parent=31 // pred_fallthru
            _
          %304 = vnop
        $region32: #{gcn_forward.2} parent=27 // pred_fallthru
          _
        // Predicated region
        $region70: #{gcn_forward.2} parent=27 // pred_check
          %p305 = pneg %p71
        $region71: #{gcn_forward.2} parent=27 // pred_check_branch
          %307 = sbr.rel (%p305) target = $region73
        $region72: #{gcn_forward.2} parent=27 // pred_region
          %s308 = smul.u32 16, %s19
          %p309 = scmp.lt.s32.totalorder %s308, 31
          %s310 = scalar_select %p309, %s308, 31
          %s311 = smul.addr %s310, 4
          %s312 = scalar_lea.vmem %s1, %s311
          %s313 = smul.u32 16, %s19
        $region73: #{gcn_forward.2} parent=27 // pred_fallthru
          _
      $region28: #{gcn_forward.2} parent=5 // pred_fallthru
        _
      %p314 = scmp.le.s32.totalorder 1, %s11
      %p315 = scmp.lt.s32.totalorder %s11, 5
      %p316 = pnand %p314, %p315
      %p317 = pneg %p316
      // Predicated region
      $region74: #{gcn_forward.2} parent=5 // pred_check
        _
      $region75: #{gcn_forward.2} parent=5 // pred_check_branch
        %319 = sbr.rel (%p316) target = $region77
      $region76: #{gcn_forward.2} parent=5 // pred_region
        %s320 = ssub.s32 %s11, 1
        %s321 = sand.u32 %s38, 1
        %s322 = sand.u32 %s38, 1
        %s323 = smul.addr %s322, 64
        %s324 = scalar_lea.vmem [#allocation3], %s323
        // Predicated region
        $region78: #{gcn_forward.2} parent=76 // pred_check
          %p325 = pneg %p51
        $region79: #{gcn_forward.2} parent=76 // pred_check_branch
          %327 = sbr.rel (%p325) target = $region81
        $region80: #{gcn_forward.2} parent=76 // pred_region
          _
        $region81: #{gcn_forward.2} parent=76 // pred_fallthru
          _
        %s328 = sand.u32 %s38, 1
        %s329 = sand.u32 %s38, 1
        %s330 = smul.addr %s329, 64
        %s331 = scalar_lea.vmem [#allocation3], %s330
        %p332 = pneg %p51
        %p333 = pneg %p48
        %s334 = smul.u32 16, %s21
        %p335 = scmp.lt.s32.totalorder %s334, 31
        %s336 = scalar_select %p335, %s334, 31
        %s337 = smul.addr %s336, 4
        %s338 = scalar_lea.vmem %s1, %s337
        %p339 = pneg %p77
        %p340 = pneg %p74
        %p341 = pneg %p98
        %p342 = pneg %p95
        %p343 = pneg %p119
        %p344 = pneg %p116
        %p345 = pneg %p140
        %p346 = pneg %p137
        %p347 = pneg %p166
        %p348 = pneg %p163
        %s349 = smul.u32 16, %s20
        %p350 = scmp.lt.s32.totalorder %s349, 31
        %s351 = scalar_select %p350, %s349, 31
        %s352 = smul.addr %s351, 4
        %s353 = scalar_lea.vmem %s5, %s352
        %s354 = smul.u32 16, %s20
        %s355 = smul.u32 16, %s21
        %p356 = scmp.lt.s32.totalorder %s355, 31
        %s357 = scalar_select %p356, %s355, 31
        %s358 = smul.addr %s357, 4
        %s359 = scalar_lea.vmem %s1, %s358
        %s360 = smul.u32 16, %s21
        %s361 = smul.u32 16, %s20
        %p362 = scmp.lt.s32.totalorder %s361, 31
        %s363 = scalar_select %p362, %s361, 31
        %s364 = smul.addr %s363, 4
        %s365 = scalar_lea.vmem %s5, %s364
        %s366 = smul.u32 16, %s20
        %p368 = scmp.eq.s32.totalorder %s21, 0
        // Predicated region
        $region82: #{gcn_forward.2} parent=76 // pred_check
          %p369 = pneg %p368
        $region83: #{gcn_forward.2} parent=76 // pred_check_branch
          %371 = sbr.rel (%p369) target = $region85
        $region84: #{gcn_forward.2} parent=76 // pred_region
          %vm372 = vcmask 130048
          %373 = vst.msk [vmem:[#allocation2] sm:$0xff] %vm372, 0.0
          %374 = vst.msk [vmem:[#allocation2 + $0x8] sm:$0xff] %vm372, 0.0
          %375 = vst.msk [vmem:[#allocation2 + $0x10] sm:$0xff] %vm372, 0.0
          %376 = vst.msk [vmem:[#allocation2 + $0x18] sm:$0xff] %vm372, 0.0
          %377 = vst.msk [vmem:[#allocation2 + $0x20] sm:$0xff] %vm372, 0.0
          %378 = vst.msk [vmem:[#allocation2 + $0x28] sm:$0xff] %vm372, 0.0
          %379 = vst.msk [vmem:[#allocation2 + $0x30] sm:$0xff] %vm372, 0.0
          %380 = vst.msk [vmem:[#allocation2 + $0x38] sm:$0xff] %vm372, 0.0
          %381 = vst.msk [vmem:[#allocation2 + $0x40] sm:$0xff] %vm372, 0.0
          %382 = vst.msk [vmem:[#allocation2 + $0x48] sm:$0xff] %vm372, 0.0
          %383 = vst.msk [vmem:[#allocation2 + $0x50] sm:$0xff] %vm372, 0.0
          %384 = vst.msk [vmem:[#allocation2 + $0x58] sm:$0xff] %vm372, 0.0
          %385 = vst.msk [vmem:[#allocation2 + $0x60] sm:$0xff] %vm372, 0.0
          %386 = vst.msk [vmem:[#allocation2 + $0x68] sm:$0xff] %vm372, 0.0
          %387 = vst.msk [vmem:[#allocation2 + $0x70] sm:$0xff] %vm372, 0.0
          %388 = vst.msk [vmem:[#allocation2 + $0x78] sm:$0xff] %vm372, 0.0
        $region85: #{gcn_forward.2} parent=76 // pred_fallthru
          _
        %v389 = vld [vmem:[#allocation2] sm:$0xff]
        %v390 = vld [vmem:[#allocation2 + $0x8] sm:$0xff]
        %v391 = vld [vmem:[#allocation2 + $0x10] sm:$0xff]
        %v392 = vld [vmem:[#allocation2 + $0x18] sm:$0xff]
        %v393 = vld [vmem:[#allocation2 + $0x20] sm:$0xff]
        %v394 = vld [vmem:[#allocation2 + $0x28] sm:$0xff]
        %v395 = vld [vmem:[#allocation2 + $0x30] sm:$0xff]
        %v396 = vld [vmem:[#allocation2 + $0x38] sm:$0xff]
        %v397 = vld [vmem:[#allocation2 + $0x40] sm:$0xff]
        %v398 = vld [vmem:[#allocation2 + $0x48] sm:$0xff]
        %v399 = vld [vmem:[#allocation2 + $0x50] sm:$0xff]
        %v400 = vld [vmem:[#allocation2 + $0x58] sm:$0xff]
        %v401 = vld [vmem:[#allocation2 + $0x60] sm:$0xff]
        %v402 = vld [vmem:[#allocation2 + $0x68] sm:$0xff]
        %v403 = vld [vmem:[#allocation2 + $0x70] sm:$0xff]
        %v404 = vld [vmem:[#allocation2 + $0x78] sm:$0xff]
        %v405 = vld [vmem:[%s324] sm:$0xf]
        %v406 = vld [vmem:[%s324 + $0x4] sm:$0xf]
        %v407 = vld [vmem:[%s324 + $0x8] sm:$0xf]
        %v408 = vld [vmem:[%s324 + $0xc] sm:$0xf]
        %v409 = vld [vmem:[%s324 + $0x10] sm:$0xf]
        %v410 = vld [vmem:[%s324 + $0x14] sm:$0xf]
        %v411 = vld [vmem:[%s324 + $0x18] sm:$0xf]
        %v412 = vld [vmem:[%s324 + $0x1c] sm:$0xf]
        %v413 = vld [vmem:[%s324 + $0x20] sm:$0xf]
        %v414 = vld [vmem:[%s324 + $0x24] sm:$0xf]
        %v415 = vld [vmem:[%s324 + $0x28] sm:$0xf]
        %v416 = vld [vmem:[%s324 + $0x2c] sm:$0xf]
        %v417 = vld [vmem:[%s324 + $0x30] sm:$0xf]
        %v418 = vld [vmem:[%s324 + $0x34] sm:$0xf]
        %v419 = vld [vmem:[%s324 + $0x38] sm:$0xf]
        %v420 = vld [vmem:[%s324 + $0x3c] sm:$0xf]
        %v421 = vld [vmem:[%s359] sm:$0xf]
        %v422 = vld [vmem:[%s359 + $0x4] sm:$0xf]
        %v423 = vld [vmem:[%s359 + $0x8] sm:$0xf]
        %v424 = vld [vmem:[%s359 + $0xc] sm:$0xf]
        %v425 = vld [vmem:[%s359 + $0x10] sm:$0xf]
        %v426 = vld [vmem:[%s359 + $0x14] sm:$0xf]
        %v427 = vld [vmem:[%s359 + $0x18] sm:$0xf]
        %v428 = vld [vmem:[%s359 + $0x1c] sm:$0xf]
        %v429 = vld [vmem:[%s359 + $0x20] sm:$0xf]
        %v430 = vld [vmem:[%s359 + $0x24] sm:$0xf]
        %v431 = vld [vmem:[%s359 + $0x28] sm:$0xf]
        %v432 = vld [vmem:[%s359 + $0x2c] sm:$0xf]
        %v433 = vld [vmem:[%s359 + $0x30] sm:$0xf]
        %v434 = vld [vmem:[%s359 + $0x34] sm:$0xf]
        %v435 = vld [vmem:[%s359 + $0x38] sm:$0xf]
        %v436 = vld [vmem:[%s359 + $0x3c] sm:$0xf]
        %v453 = vunpack.c.l.b16 %v405
        %v454 = vunpack.c.l.b16 %v406
        %v455 = vunpack.c.l.b16 %v407
        %v456 = vunpack.c.l.b16 %v408
        %v457 = vunpack.c.l.b16 %v409
        %v458 = vunpack.c.l.b16 %v410
        %v459 = vunpack.c.l.b16 %v411
        %v460 = vunpack.c.l.b16 %v412
        %v461 = vunpack.c.l.b16 %v413
        %v462 = vunpack.c.l.b16 %v414
        %v463 = vunpack.c.l.b16 %v415
        %v464 = vunpack.c.l.b16 %v416
        %v465 = vunpack.c.l.b16 %v417
        %v466 = vunpack.c.l.b16 %v418
        %v467 = vunpack.c.l.b16 %v419
        %v468 = vunpack.c.l.b16 %v420
        %v469 = vpack.c.b16 %v454, %v453
        %v470 = vpack.c.b16 %v456, %v455
        %v471 = vpack.c.b16 %v458, %v457
        %v472 = vpack.c.b16 %v460, %v459
        %v473 = vpack.c.b16 %v462, %v461
        %v474 = vpack.c.b16 %v464, %v463
        %v475 = vpack.c.b16 %v466, %v465
        %v476 = vpack.c.b16 %v468, %v467
        %v501 = vunpack.c.l.b16 %v421
        %v502 = vunpack.c.l.b16 %v422
        %v503 = vunpack.c.l.b16 %v423
        %v504 = vunpack.c.l.b16 %v424
        %v505 = vunpack.c.l.b16 %v425
        %v506 = vunpack.c.l.b16 %v426
        %v507 = vunpack.c.l.b16 %v427
        %v508 = vunpack.c.l.b16 %v428
        %v509 = vunpack.c.l.b16 %v429
        %v510 = vunpack.c.l.b16 %v430
        %v511 = vunpack.c.l.b16 %v431
        %v512 = vunpack.c.l.b16 %v432
        %v513 = vunpack.c.l.b16 %v433
        %v514 = vunpack.c.l.b16 %v434
        %v515 = vunpack.c.l.b16 %v435
        %v516 = vunpack.c.l.b16 %v436
        %v517 = vpack.c.b16 %v502, %v501
        %v518 = vpack.c.b16 %v504, %v503
        %v519 = vpack.c.b16 %v506, %v505
        %v520 = vpack.c.b16 %v508, %v507
        %v521 = vpack.c.b16 %v510, %v509
        %v522 = vpack.c.b16 %v512, %v511
        %v523 = vpack.c.b16 %v514, %v513
        %v524 = vpack.c.b16 %v516, %v515
        %533 = vmatprep.subr.bf16.mxu0 0
        %534 = vmatpush1.bf16.msra.mxu0 %v517
        %535 = vmatprep.subr.bf16.mxu0 0
        %536 = vmatpush1.bf16.msra.mxu0 %v518
        %537 = vmatprep.subr.bf16.mxu0 0
        %538 = vmatpush1.bf16.msra.mxu0 %v519
        %539 = vmatprep.subr.bf16.mxu0 0
        %540 = vmatpush1.bf16.msra.mxu0 %v520
        %541 = vmatprep.subr.bf16.mxu0 0
        %542 = vmatpush1.bf16.msra.mxu0 %v521
        %543 = vmatprep.subr.bf16.mxu0 0
        %544 = vmatpush1.bf16.msra.mxu0 %v522
        %545 = vmatprep.subr.bf16.mxu0 0
        %546 = vmatpush1.bf16.msra.mxu0 %v523
        %547 = vmatprep.subr.bf16.mxu0 0
        %548 = vmatpush1.bf16.msra.mxu0 %v524
        %549 = vmatprep.subr.bf16.mxu0 0
        %550 = vmatpush1.bf16.msra.mxu0 0
        %551 = vmatprep.subr.bf16.mxu0 0
        %552 = vmatpush1.bf16.msra.mxu0 0
        %553 = vmatprep.subr.bf16.mxu0 0
        %554 = vmatpush1.bf16.msra.mxu0 0
        %555 = vmatprep.subr.bf16.mxu0 0
        %556 = vmatpush1.bf16.msra.mxu0 0
        %557 = vmatprep.subr.bf16.mxu0 0
        %558 = vmatpush1.bf16.msra.mxu0 0
        %559 = vmatprep.subr.bf16.mxu0 0
        %560 = vmatpush1.bf16.msra.mxu0 0
        %561 = vmatprep.subr.bf16.mxu0 0
        %562 = vmatpush1.bf16.msra.mxu0 0
        %563 = vmatprep.subr.bf16.mxu0 0
        %564 = vmatpush1.bf16.msra.mxu0 0
        %565 = vmatprep.mubr.bf16.mxu0 0
        %566 = vmatmul.mubr.bf16.gmra.mrb[0].mxu0 %v469
        %v567 = vpop.f32.mrb[0].mxu0
        %v568 = vadd.f32 0.0, %v567
        %v569 = vpop.f32.mrb[0].mxu0
        %v570 = vpop.f32.mrb[0].mxu0
        %v571 = vadd.f32 0.0, %v570
        %v572 = vpop.f32.mrb[0].mxu0
        %573 = vmatprep.mubr.bf16.mxu0 0
        %574 = vmatmul.mubr.bf16.gmra.mrb[0].mxu0 %v470
        %v575 = vpop.f32.mrb[0].mxu0
        %v576 = vadd.f32 0.0, %v575
        %v577 = vpop.f32.mrb[0].mxu0
        %v578 = vpop.f32.mrb[0].mxu0
        %v579 = vadd.f32 0.0, %v578
        %v580 = vpop.f32.mrb[0].mxu0
        %581 = vmatprep.mubr.bf16.mxu0 0
        %582 = vmatmul.mubr.bf16.gmra.mrb[0].mxu0 %v471
        %v583 = vpop.f32.mrb[0].mxu0
        %v584 = vadd.f32 0.0, %v583
        %v585 = vpop.f32.mrb[0].mxu0
        %v586 = vpop.f32.mrb[0].mxu0
        %v587 = vadd.f32 0.0, %v586
        %v588 = vpop.f32.mrb[0].mxu0
        %589 = vmatprep.mubr.bf16.mxu0 0
        %590 = vmatmul.mubr.bf16.gmra.mrb[0].mxu0 %v472
        %v591 = vpop.f32.mrb[0].mxu0
        %v592 = vadd.f32 0.0, %v591
        %v593 = vpop.f32.mrb[0].mxu0
        %v594 = vpop.f32.mrb[0].mxu0
        %v595 = vadd.f32 0.0, %v594
        %v596 = vpop.f32.mrb[0].mxu0
        %597 = vmatprep.mubr.bf16.mxu0 0
        %598 = vmatmul.mubr.bf16.gmra.mrb[0].mxu0 %v473
        %v599 = vpop.f32.mrb[0].mxu0
        %v600 = vadd.f32 0.0, %v599
        %v601 = vpop.f32.mrb[0].mxu0
        %v602 = vpop.f32.mrb[0].mxu0
        %v603 = vadd.f32 0.0, %v602
        %v604 = vpop.f32.mrb[0].mxu0
        %605 = vmatprep.mubr.bf16.mxu0 0
        %606 = vmatmul.mubr.bf16.gmra.mrb[0].mxu0 %v474
        %v607 = vpop.f32.mrb[0].mxu0
        %v608 = vadd.f32 0.0, %v607
        %v609 = vpop.f32.mrb[0].mxu0
        %v610 = vpop.f32.mrb[0].mxu0
        %v611 = vadd.f32 0.0, %v610
        %v612 = vpop.f32.mrb[0].mxu0
        %613 = vmatprep.mubr.bf16.mxu0 0
        %614 = vmatmul.mubr.bf16.gmra.mrb[0].mxu0 %v475
        %v615 = vpop.f32.mrb[0].mxu0
        %v616 = vadd.f32 0.0, %v615
        %v617 = vpop.f32.mrb[0].mxu0
        %v618 = vpop.f32.mrb[0].mxu0
        %v619 = vadd.f32 0.0, %v618
        %v620 = vpop.f32.mrb[0].mxu0
        %621 = vmatprep.mubr.bf16.mxu0 0
        %622 = vmatmul.mubr.bf16.gmra.mrb[0].mxu0 %v476
        %v623 = vpop.f32.mrb[0].mxu0
        %v624 = vadd.f32 0.0, %v623
        %v625 = vpop.f32.mrb[0].mxu0
        %v626 = vpop.f32.mrb[0].mxu0
        %v627 = vadd.f32 0.0, %v626
        %v628 = vpop.f32.mrb[0].mxu0
        %629 = vdwg.mxu0
        %v630 = vadd.f32 %v389, %v568
        %v631 = vadd.f32 %v390, %v571
        %v632 = vadd.f32 %v391, %v576
        %v633 = vadd.f32 %v392, %v579
        %v634 = vadd.f32 %v393, %v584
        %v635 = vadd.f32 %v394, %v587
        %v636 = vadd.f32 %v395, %v592
        %v637 = vadd.f32 %v396, %v595
        %v638 = vadd.f32 %v397, %v600
        %v639 = vadd.f32 %v398, %v603
        %v640 = vadd.f32 %v399, %v608
        %v641 = vadd.f32 %v400, %v611
        %v642 = vadd.f32 %v401, %v616
        %v643 = vadd.f32 %v402, %v619
        %v644 = vadd.f32 %v403, %v624
        %v645 = vadd.f32 %v404, %v627
        %vm646 = vcmask 130048
        %647 = vst.msk [vmem:[#allocation2] sm:$0xff] %vm646, %v630
        %648 = vst.msk [vmem:[#allocation2 + $0x8] sm:$0xff] %vm646, %v631
        %649 = vst.msk [vmem:[#allocation2 + $0x10] sm:$0xff] %vm646, %v632
        %650 = vst.msk [vmem:[#allocation2 + $0x18] sm:$0xff] %vm646, %v633
        %651 = vst.msk [vmem:[#allocation2 + $0x20] sm:$0xff] %vm646, %v634
        %652 = vst.msk [vmem:[#allocation2 + $0x28] sm:$0xff] %vm646, %v635
        %653 = vst.msk [vmem:[#allocation2 + $0x30] sm:$0xff] %vm646, %v636
        %654 = vst.msk [vmem:[#allocation2 + $0x38] sm:$0xff] %vm646, %v637
        %655 = vst.msk [vmem:[#allocation2 + $0x40] sm:$0xff] %vm646, %v638
        %656 = vst.msk [vmem:[#allocation2 + $0x48] sm:$0xff] %vm646, %v639
        %657 = vst.msk [vmem:[#allocation2 + $0x50] sm:$0xff] %vm646, %v640
        %658 = vst.msk [vmem:[#allocation2 + $0x58] sm:$0xff] %vm646, %v641
        %659 = vst.msk [vmem:[#allocation2 + $0x60] sm:$0xff] %vm646, %v642
        %660 = vst.msk [vmem:[#allocation2 + $0x68] sm:$0xff] %vm646, %v643
        %661 = vst.msk [vmem:[#allocation2 + $0x70] sm:$0xff] %vm646, %v644
        %662 = vst.msk [vmem:[#allocation2 + $0x78] sm:$0xff] %vm646, %v645
        %p663 = scmp.eq.s32.totalorder %s21, 1
        // Predicated region
        $region86: #{gcn_forward.2} parent=76 // pred_check
          %p664 = pneg %p663
        $region87: #{gcn_forward.2} parent=76 // pred_check_branch
          %666 = sbr.rel (%p664) target = $region89
        $region88: #{gcn_forward.2} parent=76 // pred_region
          %v667 = vld [vmem:[#allocation2] sm:$0xff]
          %v668 = vld [vmem:[#allocation2 + $0x8] sm:$0xff]
          %v669 = vld [vmem:[#allocation2 + $0x10] sm:$0xff]
          %v670 = vld [vmem:[#allocation2 + $0x18] sm:$0xff]
          %v671 = vld [vmem:[#allocation2 + $0x20] sm:$0xff]
          %v672 = vld [vmem:[#allocation2 + $0x28] sm:$0xff]
          %v673 = vld [vmem:[#allocation2 + $0x30] sm:$0xff]
          %v674 = vld [vmem:[#allocation2 + $0x38] sm:$0xff]
          %v675 = vld [vmem:[#allocation2 + $0x40] sm:$0xff]
          %v676 = vld [vmem:[#allocation2 + $0x48] sm:$0xff]
          %v677 = vld [vmem:[#allocation2 + $0x50] sm:$0xff]
          %v678 = vld [vmem:[#allocation2 + $0x58] sm:$0xff]
          %v679 = vld [vmem:[#allocation2 + $0x60] sm:$0xff]
          %v680 = vld [vmem:[#allocation2 + $0x68] sm:$0xff]
          %v681 = vld [vmem:[#allocation2 + $0x70] sm:$0xff]
          %v682 = vld [vmem:[#allocation2 + $0x78] sm:$0xff]
          %v683 = vpack.c.bf16 %v668, %v667
          %v684 = vpack.c.bf16 %v670, %v669
          %v685 = vpack.c.bf16 %v672, %v671
          %v686 = vpack.c.bf16 %v674, %v673
          %v687 = vpack.c.bf16 %v676, %v675
          %v688 = vpack.c.bf16 %v678, %v677
          %v689 = vpack.c.bf16 %v680, %v679
          %v690 = vpack.c.bf16 %v682, %v681
          %v691 = vld [vmem:[%s2] sm:$0xf]
          %v692 = vld [vmem:[%s2 + $0x4] sm:$0xf]
          %v693 = vld [vmem:[%s3] sm:$0x1]
          %v695 = vlaneseq
          %v696 = vshrl.u32 %v695, 7
          %v697 = vsub.s32 0, %v696
          %v698 = vrot.slane %v693, %v697
          %v702 = vunpack.c.l.b16 %v691
          %v703 = vunpack.c.l.b16 %v692
          %v704 = vpack.c.b16 %v703, %v702
          %v707 = vsel %vm646, %v683, 0
          %v710 = vsel %vm646, %v684, 0
          %v713 = vsel %vm646, %v685, 0
          %v716 = vsel %vm646, %v686, 0
          %v719 = vsel %vm646, %v687, 0
          %v722 = vsel %vm646, %v688, 0
          %v725 = vsel %vm646, %v689, 0
          %v728 = vsel %vm646, %v690, 0
          %730 = vmatprep.subr.bf16.mxu0 0
          %731 = vmatpush1.bf16.msra.mxu0 %v704
          %732 = vmatprep.subr.bf16.mxu0 0
          %733 = vmatpush1.bf16.msra.mxu0 0
          %734 = vmatprep.subr.bf16.mxu0 0
          %735 = vmatpush1.bf16.msra.mxu0 0
          %736 = vmatprep.subr.bf16.mxu0 0
          %737 = vmatpush1.bf16.msra.mxu0 0
          %738 = vmatprep.subr.bf16.mxu0 0
          %739 = vmatpush1.bf16.msra.mxu0 0
          %740 = vmatprep.subr.bf16.mxu0 0
          %741 = vmatpush1.bf16.msra.mxu0 0
          %742 = vmatprep.subr.bf16.mxu0 0
          %743 = vmatpush1.bf16.msra.mxu0 0
          %744 = vmatprep.subr.bf16.mxu0 0
          %745 = vmatpush1.bf16.msra.mxu0 0
          %746 = vmatprep.subr.bf16.mxu0 0
          %747 = vmatpush1.bf16.msra.mxu0 0
          %748 = vmatprep.subr.bf16.mxu0 0
          %749 = vmatpush1.bf16.msra.mxu0 0
          %750 = vmatprep.subr.bf16.mxu0 0
          %751 = vmatpush1.bf16.msra.mxu0 0
          %752 = vmatprep.subr.bf16.mxu0 0
          %753 = vmatpush1.bf16.msra.mxu0 0
          %754 = vmatprep.subr.bf16.mxu0 0
          %755 = vmatpush1.bf16.msra.mxu0 0
          %756 = vmatprep.subr.bf16.mxu0 0
          %757 = vmatpush1.bf16.msra.mxu0 0
          %758 = vmatprep.subr.bf16.mxu0 0
          %759 = vmatpush1.bf16.msra.mxu0 0
          %760 = vmatprep.subr.bf16.mxu0 0
          %761 = vmatpush1.bf16.msra.mxu0 0
          %762 = vmatprep.mubr.bf16.mxu0 0
          %763 = vmatmul.mubr.bf16.gmra.mrb[0].mxu0 %v707
          %v764 = vpop.f32.mrb[0].mxu0
          %v765 = vadd.f32 %v698, %v764
          %v766 = vpop.f32.mrb[0].mxu0
          %v767 = vpop.f32.mrb[0].mxu0
          %v768 = vadd.f32 %v698, %v767
          %v769 = vpop.f32.mrb[0].mxu0
          %770 = vmatprep.mubr.bf16.mxu0 0
          %771 = vmatmul.mubr.bf16.gmra.mrb[0].mxu0 %v710
          %v772 = vpop.f32.mrb[0].mxu0
          %v773 = vadd.f32 %v698, %v772
          %v774 = vpop.f32.mrb[0].mxu0
          %v775 = vpop.f32.mrb[0].mxu0
          %v776 = vadd.f32 %v698, %v775
          %v777 = vpop.f32.mrb[0].mxu0
          %778 = vmatprep.mubr.bf16.mxu0 0
          %779 = vmatmul.mubr.bf16.gmra.mrb[0].mxu0 %v713
          %v780 = vpop.f32.mrb[0].mxu0
          %v781 = vadd.f32 %v698, %v780
          %v782 = vpop.f32.mrb[0].mxu0
          %v783 = vpop.f32.mrb[0].mxu0
          %v784 = vadd.f32 %v698, %v783
          %v785 = vpop.f32.mrb[0].mxu0
          %786 = vmatprep.mubr.bf16.mxu0 0
          %787 = vmatmul.mubr.bf16.gmra.mrb[0].mxu0 %v716
          %v788 = vpop.f32.mrb[0].mxu0
          %v789 = vadd.f32 %v698, %v788
          %v790 = vpop.f32.mrb[0].mxu0
          %v791 = vpop.f32.mrb[0].mxu0
          %v792 = vadd.f32 %v698, %v791
          %v793 = vpop.f32.mrb[0].mxu0
          %794 = vmatprep.mubr.bf16.mxu0 0
          %795 = vmatmul.mubr.bf16.gmra.mrb[0].mxu0 %v719
          %v796 = vpop.f32.mrb[0].mxu0
          %v797 = vadd.f32 %v698, %v796
          %v798 = vpop.f32.mrb[0].mxu0
          %v799 = vpop.f32.mrb[0].mxu0
          %v800 = vadd.f32 %v698, %v799
          %v801 = vpop.f32.mrb[0].mxu0
          %802 = vmatprep.mubr.bf16.mxu0 0
          %803 = vmatmul.mubr.bf16.gmra.mrb[0].mxu0 %v722
          %v804 = vpop.f32.mrb[0].mxu0
          %v805 = vadd.f32 %v698, %v804
          %v806 = vpop.f32.mrb[0].mxu0
          %v807 = vpop.f32.mrb[0].mxu0
          %v808 = vadd.f32 %v698, %v807
          %v809 = vpop.f32.mrb[0].mxu0
          %810 = vmatprep.mubr.bf16.mxu0 0
          %811 = vmatmul.mubr.bf16.gmra.mrb[0].mxu0 %v725
          %v812 = vpop.f32.mrb[0].mxu0
          %v813 = vadd.f32 %v698, %v812
          %v814 = vpop.f32.mrb[0].mxu0
          %v815 = vpop.f32.mrb[0].mxu0
          %v816 = vadd.f32 %v698, %v815
          %v817 = vpop.f32.mrb[0].mxu0
          %818 = vmatprep.mubr.bf16.mxu0 0
          %819 = vmatmul.mubr.bf16.gmra.mrb[0].mxu0 %v728
          %v820 = vpop.f32.mrb[0].mxu0
          %v821 = vadd.f32 %v698, %v820
          %v822 = vpop.f32.mrb[0].mxu0
          %v823 = vpop.f32.mrb[0].mxu0
          %v824 = vadd.f32 %v698, %v823
          %v825 = vpop.f32.mrb[0].mxu0
          %826 = vdwg.mxu0
          %v827 = vmax.f32 %v765, 0.0
          %v828 = vmax.f32 %v768, 0.0
          %v829 = vmax.f32 %v773, 0.0
          %v830 = vmax.f32 %v776, 0.0
          %v831 = vmax.f32 %v781, 0.0
          %v832 = vmax.f32 %v784, 0.0
          %v833 = vmax.f32 %v789, 0.0
          %v834 = vmax.f32 %v792, 0.0
          %v835 = vmax.f32 %v797, 0.0
          %v836 = vmax.f32 %v800, 0.0
          %v837 = vmax.f32 %v805, 0.0
          %v838 = vmax.f32 %v808, 0.0
          %v839 = vmax.f32 %v813, 0.0
          %v840 = vmax.f32 %v816, 0.0
          %v841 = vmax.f32 %v821, 0.0
          %v842 = vmax.f32 %v824, 0.0
          %v843 = vpack.c.bf16 %v828, %v827
          %v844 = vpack.c.bf16 %v830, %v829
          %v845 = vpack.c.bf16 %v832, %v831
          %v846 = vpack.c.bf16 %v834, %v833
          %v847 = vpack.c.bf16 %v836, %v835
          %v848 = vpack.c.bf16 %v838, %v837
          %v849 = vpack.c.bf16 %v840, %v839
          %v850 = vpack.c.bf16 %v842, %v841
          %v851 = vld [vmem:[%s4] sm:$0xf]
          %v852 = vld [vmem:[%s4 + $0x4] sm:$0xf]
          %v853 = vld [vmem:[%s4 + $0x8] sm:$0xf]
          %v854 = vld [vmem:[%s4 + $0xc] sm:$0xf]
          %v855 = vld [vmem:[%s4 + $0x10] sm:$0xf]
          %v856 = vld [vmem:[%s4 + $0x14] sm:$0xf]
          %v857 = vld [vmem:[%s4 + $0x18] sm:$0xf]
          %v858 = vld [vmem:[%s4 + $0x1c] sm:$0xf]
          %v859 = vld [vmem:[%s4 + $0x20] sm:$0xf]
          %v860 = vld [vmem:[%s4 + $0x24] sm:$0xf]
          %v861 = vld [vmem:[%s4 + $0x28] sm:$0xf]
          %v862 = vld [vmem:[%s4 + $0x2c] sm:$0xf]
          %v863 = vld [vmem:[%s4 + $0x30] sm:$0xf]
          %v864 = vld [vmem:[%s4 + $0x34] sm:$0xf]
          %v865 = vld [vmem:[%s4 + $0x38] sm:$0xf]
          %v866 = vld [vmem:[%s4 + $0x3c] sm:$0xf]
          %v883 = vunpack.c.l.b16 %v851
          %v884 = vunpack.c.l.b16 %v852
          %v885 = vunpack.c.l.b16 %v853
          %v886 = vunpack.c.l.b16 %v854
          %v887 = vunpack.c.l.b16 %v855
          %v888 = vunpack.c.l.b16 %v856
          %v889 = vunpack.c.l.b16 %v857
          %v890 = vunpack.c.l.b16 %v858
          %v891 = vunpack.c.l.b16 %v859
          %v892 = vunpack.c.l.b16 %v860
          %v893 = vunpack.c.l.b16 %v861
          %v894 = vunpack.c.l.b16 %v862
          %v895 = vunpack.c.l.b16 %v863
          %v896 = vunpack.c.l.b16 %v864
          %v897 = vunpack.c.l.b16 %v865
          %v898 = vunpack.c.l.b16 %v866
          %v899 = vpack.c.b16 %v884, %v883
          %v900 = vpack.c.b16 %v886, %v885
          %v901 = vpack.c.b16 %v888, %v887
          %v902 = vpack.c.b16 %v890, %v889
          %v903 = vpack.c.b16 %v892, %v891
          %v904 = vpack.c.b16 %v894, %v893
          %v905 = vpack.c.b16 %v896, %v895
          %v906 = vpack.c.b16 %v898, %v897
          %915 = vmatprep.subr.bf16.mxu0 0
          %916 = vmatpush1.bf16.msra.mxu0 %v899
          %917 = vmatprep.subr.bf16.mxu0 0
          %918 = vmatpush1.bf16.msra.mxu0 %v900
          %919 = vmatprep.subr.bf16.mxu0 0
          %920 = vmatpush1.bf16.msra.mxu0 %v901
          %921 = vmatprep.subr.bf16.mxu0 0
          %922 = vmatpush1.bf16.msra.mxu0 %v902
          %923 = vmatprep.subr.bf16.mxu0 0
          %924 = vmatpush1.bf16.msra.mxu0 %v903
          %925 = vmatprep.subr.bf16.mxu0 0
          %926 = vmatpush1.bf16.msra.mxu0 %v904
          %927 = vmatprep.subr.bf16.mxu0 0
          %928 = vmatpush1.bf16.msra.mxu0 %v905
          %929 = vmatprep.subr.bf16.mxu0 0
          %930 = vmatpush1.bf16.msra.mxu0 %v906
          %931 = vmatprep.subr.bf16.mxu0 0
          %932 = vmatpush1.bf16.msra.mxu0 0
          %933 = vmatprep.subr.bf16.mxu0 0
          %934 = vmatpush1.bf16.msra.mxu0 0
          %935 = vmatprep.subr.bf16.mxu0 0
          %936 = vmatpush1.bf16.msra.mxu0 0
          %937 = vmatprep.subr.bf16.mxu0 0
          %938 = vmatpush1.bf16.msra.mxu0 0
          %939 = vmatprep.subr.bf16.mxu0 0
          %940 = vmatpush1.bf16.msra.mxu0 0
          %941 = vmatprep.subr.bf16.mxu0 0
          %942 = vmatpush1.bf16.msra.mxu0 0
          %943 = vmatprep.subr.bf16.mxu0 0
          %944 = vmatpush1.bf16.msra.mxu0 0
          %945 = vmatprep.subr.bf16.mxu0 0
          %946 = vmatpush1.bf16.msra.mxu0 0
          %947 = vmatprep.mubr.bf16.mxu0 0
          %948 = vmatmul.mubr.bf16.gmra.mrb[0].mxu0 %v843
          %v949 = vpop.f32.mrb[0].mxu0
          %v950 = vadd.f32 0.0, %v949
          %v951 = vpop.f32.mrb[0].mxu0
          %v952 = vpop.f32.mrb[0].mxu0
          %v953 = vadd.f32 0.0, %v952
          %v954 = vpop.f32.mrb[0].mxu0
          %955 = vmatprep.mubr.bf16.mxu0 0
          %956 = vmatmul.mubr.bf16.gmra.mrb[0].mxu0 %v844
          %v957 = vpop.f32.mrb[0].mxu0
          %v958 = vadd.f32 0.0, %v957
          %v959 = vpop.f32.mrb[0].mxu0
          %v960 = vpop.f32.mrb[0].mxu0
          %v961 = vadd.f32 0.0, %v960
          %v962 = vpop.f32.mrb[0].mxu0
          %963 = vmatprep.mubr.bf16.mxu0 0
          %964 = vmatmul.mubr.bf16.gmra.mrb[0].mxu0 %v845
          %v965 = vpop.f32.mrb[0].mxu0
          %v966 = vadd.f32 0.0, %v965
          %v967 = vpop.f32.mrb[0].mxu0
          %v968 = vpop.f32.mrb[0].mxu0
          %v969 = vadd.f32 0.0, %v968
          %v970 = vpop.f32.mrb[0].mxu0
          %971 = vmatprep.mubr.bf16.mxu0 0
          %972 = vmatmul.mubr.bf16.gmra.mrb[0].mxu0 %v846
          %v973 = vpop.f32.mrb[0].mxu0
          %v974 = vadd.f32 0.0, %v973
          %v975 = vpop.f32.mrb[0].mxu0
          %v976 = vpop.f32.mrb[0].mxu0
          %v977 = vadd.f32 0.0, %v976
          %v978 = vpop.f32.mrb[0].mxu0
          %979 = vmatprep.mubr.bf16.mxu0 0
          %980 = vmatmul.mubr.bf16.gmra.mrb[0].mxu0 %v847
          %v981 = vpop.f32.mrb[0].mxu0
          %v982 = vadd.f32 0.0, %v981
          %v983 = vpop.f32.mrb[0].mxu0
          %v984 = vpop.f32.mrb[0].mxu0
          %v985 = vadd.f32 0.0, %v984
          %v986 = vpop.f32.mrb[0].mxu0
          %987 = vmatprep.mubr.bf16.mxu0 0
          %988 = vmatmul.mubr.bf16.gmra.mrb[0].mxu0 %v848
          %v989 = vpop.f32.mrb[0].mxu0
          %v990 = vadd.f32 0.0, %v989
          %v991 = vpop.f32.mrb[0].mxu0
          %v992 = vpop.f32.mrb[0].mxu0
          %v993 = vadd.f32 0.0, %v992
          %v994 = vpop.f32.mrb[0].mxu0
          %995 = vmatprep.mubr.bf16.mxu0 0
          %996 = vmatmul.mubr.bf16.gmra.mrb[0].mxu0 %v849
          %v997 = vpop.f32.mrb[0].mxu0
          %v998 = vadd.f32 0.0, %v997
          %v999 = vpop.f32.mrb[0].mxu0
          %v1000 = vpop.f32.mrb[0].mxu0
          %v1001 = vadd.f32 0.0, %v1000
          %v1002 = vpop.f32.mrb[0].mxu0
          %1003 = vmatprep.mubr.bf16.mxu0 0
          %1004 = vmatmul.mubr.bf16.gmra.mrb[0].mxu0 %v850
          %v1005 = vpop.f32.mrb[0].mxu0
          %v1006 = vadd.f32 0.0, %v1005
          %v1007 = vpop.f32.mrb[0].mxu0
          %v1008 = vpop.f32.mrb[0].mxu0
          %v1009 = vadd.f32 0.0, %v1008
          %v1010 = vpop.f32.mrb[0].mxu0
          %1011 = vdwg.mxu0
          %v1012 = vpack.c.bf16 %v953, %v950
          %v1013 = vpack.c.bf16 %v961, %v958
          %v1014 = vpack.c.bf16 %v969, %v966
          %v1015 = vpack.c.bf16 %v977, %v974
          %v1016 = vpack.c.bf16 %v985, %v982
          %v1017 = vpack.c.bf16 %v993, %v990
          %v1018 = vpack.c.bf16 %v1001, %v998
          %v1019 = vpack.c.bf16 %v1009, %v1006
          %v1028 = vunpack.c.l.b16 %v1012
          %v1029 = vunpack.c.h.b16 %v1012
          %v1030 = vunpack.c.l.b16 %v1013
          %v1031 = vunpack.c.h.b16 %v1013
          %v1032 = vunpack.c.l.b16 %v1014
          %v1033 = vunpack.c.h.b16 %v1014
          %v1034 = vunpack.c.l.b16 %v1015
          %v1035 = vunpack.c.h.b16 %v1015
          %v1036 = vunpack.c.l.b16 %v1016
          %v1037 = vunpack.c.h.b16 %v1016
          %v1038 = vunpack.c.l.b16 %v1017
          %v1039 = vunpack.c.h.b16 %v1017
          %v1040 = vunpack.c.l.b16 %v1018
          %v1041 = vunpack.c.h.b16 %v1018
          %v1042 = vunpack.c.l.b16 %v1019
          %v1043 = vunpack.c.h.b16 %v1019
          %v1044 = vpack.c.b16 %v1028, %v1028
          %v1045 = vpack.c.b16 %v1029, %v1029
          %v1046 = vpack.c.b16 %v1030, %v1030
          %v1047 = vpack.c.b16 %v1031, %v1031
          %v1048 = vpack.c.b16 %v1032, %v1032
          %v1049 = vpack.c.b16 %v1033, %v1033
          %v1050 = vpack.c.b16 %v1034, %v1034
          %v1051 = vpack.c.b16 %v1035, %v1035
          %v1052 = vpack.c.b16 %v1036, %v1036
          %v1053 = vpack.c.b16 %v1037, %v1037
          %v1054 = vpack.c.b16 %v1038, %v1038
          %v1055 = vpack.c.b16 %v1039, %v1039
          %v1056 = vpack.c.b16 %v1040, %v1040
          %v1057 = vpack.c.b16 %v1041, %v1041
          %v1058 = vpack.c.b16 %v1042, %v1042
          %v1059 = vpack.c.b16 %v1043, %v1043
          %1076 = vst [vmem:[%s365] sm:$0xf] %v1044
          %1077 = vst [vmem:[%s365 + $0x4] sm:$0xf] %v1045
          %1078 = vst [vmem:[%s365 + $0x8] sm:$0xf] %v1046
          %1079 = vst [vmem:[%s365 + $0xc] sm:$0xf] %v1047
          %1080 = vst [vmem:[%s365 + $0x10] sm:$0xf] %v1048
          %1081 = vst [vmem:[%s365 + $0x14] sm:$0xf] %v1049
          %1082 = vst [vmem:[%s365 + $0x18] sm:$0xf] %v1050
          %1083 = vst [vmem:[%s365 + $0x1c] sm:$0xf] %v1051
          %1084 = vst [vmem:[%s365 + $0x20] sm:$0xf] %v1052
          %1085 = vst [vmem:[%s365 + $0x24] sm:$0xf] %v1053
          %1086 = vst [vmem:[%s365 + $0x28] sm:$0xf] %v1054
          %1087 = vst [vmem:[%s365 + $0x2c] sm:$0xf] %v1055
          %1088 = vst [vmem:[%s365 + $0x30] sm:$0xf] %v1056
          %1089 = vst [vmem:[%s365 + $0x34] sm:$0xf] %v1057
          %1090 = vst [vmem:[%s365 + $0x38] sm:$0xf] %v1058
          %1091 = vst [vmem:[%s365 + $0x3c] sm:$0xf] %v1059
        $region89: #{gcn_forward.2} parent=76 // pred_fallthru
          _
        %s1092 = smul.u32 16, %s20
        %p1093 = scmp.lt.s32.totalorder %s1092, 31
        %s1094 = scalar_select %p1093, %s1092, 31
        %s1095 = smul.addr %s1094, 4
        %s1096 = scalar_lea.vmem %s5, %s1095
        // Predicated region
        $region90: #{gcn_forward.2} parent=76 // pred_check
          %p1097 = pneg %p163
        $region91: #{gcn_forward.2} parent=76 // pred_check_branch
          %1099 = sbr.rel (%p1097) target = $region93
        $region92: #{gcn_forward.2} parent=76 // pred_region
          %s1100 = smul.u32 16, %s20
        $region93: #{gcn_forward.2} parent=76 // pred_fallthru
          _
      $region77: #{gcn_forward.2} parent=5 // pred_fallthru
        _
      %p1101 = scmp.le.s32.totalorder 2, %s11
      // Predicated region
      $region94: #{gcn_forward.2} parent=5 // pred_check
        %p1102 = pneg %p1101
      $region95: #{gcn_forward.2} parent=5 // pred_check_branch
        %1104 = sbr.rel (%p1102) target = $region97
      $region96: #{gcn_forward.2} parent=5 // pred_region
        %s1105 = ssub.s32 %s11, 2
        // Predicated region
        $region98: #{gcn_forward.2} parent=96 // pred_check
          %p1106 = pneg %p169
        $region99: #{gcn_forward.2} parent=96 // pred_check_branch
          %1108 = sbr.rel (%p1106) target = $region101
        $region100: #{gcn_forward.2} parent=96 // pred_region
          %s1109 = smul.u32 16, %s22
          %p1110 = scmp.lt.s32.totalorder %s1109, 31
          %s1111 = scalar_select %p1110, %s1109, 31
          %s1112 = smul.addr %s1111, 4
          %s1113 = scalar_lea.vmem %s5, %s1112
        $region101: #{gcn_forward.2} parent=96 // pred_fallthru
          _
      $region97: #{gcn_forward.2} parent=5 // pred_fallthru
        _
    $region6: #{gcn_forward.2} parent=1 // loop_footer
      %s15 = sadd.s32 1, %s11
    $region7: #{gcn_forward.2} parent=1 // loop_footer_branch
      %10 = sbr.rel target = $region3
    $region8: #{gcn_forward.2} parent=1 // loop_exit
      _

// kernel: gcn_forward.3
$region0: #{gcn_forward.3}
  #allocation0 [shape = 'u32[]', space=smem, size = 0x4, offset = 0x4, fixed_abs, tag = 'smem constant byte address 0x4 - core index']
  #allocation1 [shape = 'u32[144,128]{1,0:T(1,128)}', space=vmem, size = 0x12000, scoped, tag = 'internal scratch']
  #allocation2 [shape = 'f32[128,128]{1,0:T(8,128)}', space=vmem, size = 0x10000, scoped, tag = 'scratch operand']
  %s0 = inlined_call_operand.vmem [shape: bf16[256,256], index: 0, kind: input, shape index: {}]
  %s1 = inlined_call_operand.vmem [shape: bf16[256,128], index: 1, kind: input, shape index: {}]
  %s2 = inlined_call_operand.vmem [shape: f32[1,128], index: 2, kind: input, shape index: {}]
  %s3 = inlined_call_operand.vmem [shape: f32[256,128], index: 3, kind: output, shape index: {}]
  %s4 = sld [smem:[#allocation0]]
  $region94: #{gcn_forward.3} parent=0
    _
  %s6 = ssub.s32 1, %s4
  %s7 = scalar_select 0, %s6, %s4
  $region1: #{gcn_forward.3} parent=0
    #allocation3 [shape = 'u8[65536]{0}', space=vmem, size = 0x10000, scoped, tag = 'input window, operand 0']
    loop: start=0, step=1, limit=6
    $region2: #{gcn_forward.3} parent=1 // loop_pre_header
      _
    $region3: #{gcn_forward.3} parent=1 // loop_header
      %s9 = sphi 0, %s13
      %p10 = scmp.ge.s32.totalorder %s9, 6
      %s16 = sphi 0, %s28
      %s17 = sphi 0, %s24
      %s18 = sphi 0, %s16
      %s19 = sphi 0, %s17
      %s20 = sphi 0, %s18
      %s21 = sphi 0, %s19
      %s33 = sphi 0, %s35
      %s36 = sphi 0, %s33
      %s37 = sphi 0, %s36
      %s53 = sphi 0, %s37
      %s59 = sphi 0, %s61
      %s62 = sphi 0, %s59
      %s63 = sphi 0, %s62
      %s79 = sphi 0, %s63
      %s83 = sphi 0, %s83
      %s85 = sphi 0, %s83
      %s86 = sphi 0, %s85
      %s100 = sphi 0, %s86
      %s106 = sphi 0, %s108
      %s109 = sphi 0, %s106
      %s110 = sphi 0, %s109
      %s126 = sphi 0, %s110
    $region4: #{gcn_forward.3} parent=1 // loop_header_branch
      %12 = sbr.rel (%p10) target = $region8
    $region5: #{gcn_forward.3} parent=1 // loop_body
      %s14 = ssub.s32 %s9, 1
      %s15 = ssub.s32 %s9, 2
      %s22 = sadd.s32 1, %s17
      %p23 = scmp.ge.s32.totalorder %s22, 2
      %s24 = scalar_select %p23, 0, %s22
      %s25 = sadd.s32 1, %s16
      %s26 = scalar_select %p23, %s25, %s16
      %p27 = scmp.ge.s32.totalorder %s26, 2
      %s28 = scalar_select %p27, 0, %s26
      %s29 = ssub.s32 %s16, %s28
      %s30 = ssub.s32 %s17, %s24
      %s31 = sor.u32 %s29, %s30
      %p32 = scmp.eq.s32.totalorder %s31, 0
      %s34 = sadd.s32 %s33, 1
      %s35 = scalar_select %p32, %s33, %s34
      %p38 = pneg %p32
      %p39 = scmp.eq.s32.totalorder %s9, 3
      %p40 = por %p38, %p39
      %p41 = scmp.ne.s32.totalorder %s33, %s36
      %p42 = scmp.eq.s32.totalorder %s9, 0
      %p43 = por %p41, %p42
      %p44 = scmp.ne.s32.totalorder %s33, %s36
      %p45 = scmp.eq.s32.totalorder %s14, 3
      %p46 = por %p44, %p45
      %p47 = scmp.ne.s32.totalorder %s36, %s37
      %p48 = scmp.eq.s32.totalorder %s14, 0
      %p49 = por %p47, %p48
      %p50 = scmp.ne.s32.totalorder %s36, %s37
      %p51 = scmp.eq.s32.totalorder %s15, 3
      %p52 = por %p50, %p51
      %p54 = scmp.ne.s32.totalorder %s37, %s53
      %p55 = scmp.eq.s32.totalorder %s15, 0
      %p56 = por %p54, %p55
      %s57 = ssub.s32 %s17, %s24
      %p58 = scmp.eq.s32.totalorder %s57, 0
      %s60 = sadd.s32 %s59, 1
      %s61 = scalar_select %p58, %s59, %s60
      %p64 = pneg %p58
      %p65 = scmp.eq.s32.totalorder %s9, 3
      %p66 = por %p64, %p65
      %p67 = scmp.ne.s32.totalorder %s59, %s62
      %p68 = scmp.eq.s32.totalorder %s9, 0
      %p69 = por %p67, %p68
      %p70 = scmp.ne.s32.totalorder %s59, %s62
      %p71 = scmp.eq.s32.totalorder %s14, 3
      %p72 = por %p70, %p71
      %p73 = scmp.ne.s32.totalorder %s62, %s63
      %p74 = scmp.eq.s32.totalorder %s14, 0
      %p75 = por %p73, %p74
      %p76 = scmp.ne.s32.totalorder %s62, %s63
      %p77 = scmp.eq.s32.totalorder %s15, 3
      %p78 = por %p76, %p77
      %p80 = scmp.ne.s32.totalorder %s63, %s79
      %p81 = scmp.eq.s32.totalorder %s15, 0
      %p82 = por %p80, %p81
      %s84 = sadd.s32 %s83, 1
      %p87 = scmp.eq.s32.totalorder %s9, 3
      %p88 = scmp.ne.s32.totalorder %s83, %s85
      %p89 = scmp.eq.s32.totalorder %s9, 0
      %p90 = por %p88, %p89
      %p91 = scmp.ne.s32.totalorder %s83, %s85
      %p92 = scmp.eq.s32.totalorder %s14, 3
      %p93 = por %p91, %p92
      %p94 = scmp.ne.s32.totalorder %s85, %s86
      %p95 = scmp.eq.s32.totalorder %s14, 0
      %p96 = por %p94, %p95
      %p97 = scmp.ne.s32.totalorder %s85, %s86
      %p98 = scmp.eq.s32.totalorder %s15, 3
      %p99 = por %p97, %p98
      %p101 = scmp.ne.s32.totalorder %s86, %s100
      %p102 = scmp.eq.s32.totalorder %s15, 0
      %p103 = por %p101, %p102
      %s104 = ssub.s32 %s16, %s28
      %p105 = scmp.eq.s32.totalorder %s104, 0
      %s107 = sadd.s32 %s106, 1
      %s108 = scalar_select %p105, %s106, %s107
      %p111 = pneg %p105
      %p112 = scmp.eq.s32.totalorder %s9, 3
      %p113 = por %p111, %p112
      %p114 = scmp.ne.s32.totalorder %s106, %s109
      %p115 = scmp.eq.s32.totalorder %s9, 0
      %p116 = por %p114, %p115
      %p117 = scmp.ne.s32.totalorder %s106, %s109
      %p118 = scmp.eq.s32.totalorder %s14, 3
      %p119 = por %p117, %p118
      %p120 = scmp.ne.s32.totalorder %s109, %s110
      %p121 = scmp.eq.s32.totalorder %s14, 0
      %p122 = por %p120, %p121
      %p123 = scmp.ne.s32.totalorder %s109, %s110
      %p124 = scmp.eq.s32.totalorder %s15, 3
      %p125 = por %p123, %p124
      %p127 = scmp.ne.s32.totalorder %s110, %s126
      %p128 = scmp.eq.s32.totalorder %s15, 0
      %p129 = por %p127, %p128
      %p130 = scmp.le.s32.totalorder 1, %s9
      %p131 = scmp.lt.s32.totalorder %s9, 5
      %p132 = pnand %p130, %p131
      %p133 = pneg %p132
      // Predicated region
      $region9: #{gcn_forward.3} parent=5 // pred_check
        _
      $region10: #{gcn_forward.3} parent=5 // pred_check_branch
        %135 = sbr.rel (%p132) target = $region12
      $region11: #{gcn_forward.3} parent=5 // pred_region
        %s136 = ssub.s32 %s9, 1
        // Predicated region
        $region13: #{gcn_forward.3} parent=11 // pred_check
          %p137 = pneg %p96
        $region14: #{gcn_forward.3} parent=11 // pred_check_branch
          %139 = sbr.rel (%p137) target = $region16
        $region15: #{gcn_forward.3} parent=11 // pred_region
          _
        $region16: #{gcn_forward.3} parent=11 // pred_fallthru
          _
      $region12: #{gcn_forward.3} parent=5 // pred_fallthru
        _
      %p140 = scmp.lt.s32.totalorder %s9, 4
      // Predicated region
      $region17: #{gcn_forward.3} parent=5 // pred_check
        %p141 = pneg %p140
      $region18: #{gcn_forward.3} parent=5 // pred_check_branch
        %143 = sbr.rel (%p141) target = $region20
      $region19: #{gcn_forward.3} parent=5 // pred_region
        // Predicated region
        $region21: #{gcn_forward.3} parent=19 // pred_check
          %p144 = pneg %p43
        $region22: #{gcn_forward.3} parent=19 // pred_check_branch
          %146 = sbr.rel (%p144) target = $region24
        $region23: #{gcn_forward.3} parent=19 // pred_region
          %s147 = sand.u32 %s33, 1
          %s148 = sand.u32 %s33, 1
          %s149 = smul.addr %s148, 64
          %s150 = scalar_lea.vmem [#allocation3], %s149
          %s151 = smul.u32 16, %s16
          %s152 = smul.addr %s151, 2
          %s153 = sadd.s32 %s17, %s152
          %s154 = smul.addr %s153, 4
          %s155 = scalar_lea.vmem %s0, %s154
          // Predicated region
          $region25: #{gcn_forward.3} parent=23 // pred_check
            _
          $region26: #{gcn_forward.3} parent=23 // pred_check_branch
            %157 = sbr.rel (0) target = $region28
          $region27: #{gcn_forward.3} parent=23 // pred_region
            // Predicated region
            $region29: #{gcn_forward.3} parent=27 // pred_check
              _
            $region30: #{gcn_forward.3} parent=27 // pred_check_branch
              %159 = sbr.rel target = $region32
            $region31: #{gcn_forward.3} parent=27 // pred_region
              // Predicated region
              $region44: #{gcn_forward.3} parent=31 // pred_check
                _
              $region45: #{gcn_forward.3} parent=31 // pred_check_branch
                %204 = sbr.rel (0) target = $region47
              $region46: #{gcn_forward.3} parent=31 // pred_region
                loop: start=0, step=1, limit=1
                $region48: #{gcn_forward.3} parent=46 // loop_pre_header
                  _
                $region49: #{gcn_forward.3} parent=46 // loop_header
                  %s206 = sphi 0, %s210
                  %p207 = scmp.ge.s32.totalorder %s206, 1
                  %s211 = sphi %s155, %s155
                  %s212 = sphi %s150, %s150
                $region50: #{gcn_forward.3} parent=46 // loop_header_branch
                  %209 = sbr.rel (%p207) target = $region54
                $region51: #{gcn_forward.3} parent=46 // loop_body
                  _
                $region52: #{gcn_forward.3} parent=46 // loop_footer
                  %s210 = sadd.s32 1, %s206
                $region53: #{gcn_forward.3} parent=46 // loop_footer_branch
                  %205 = sbr.rel target = $region49
                $region54: #{gcn_forward.3} parent=46 // loop_exit
                  _
                loop: start=0, step=1, limit=1
                $region55: #{gcn_forward.3} parent=46 // loop_pre_header
                  _
                $region56: #{gcn_forward.3} parent=46 // loop_header
                  %s215 = sphi 0, %s219
                  %p216 = scmp.ge.s32.totalorder %s215, 1
                  %s220 = sphi %s155, %s155
                  %s221 = sphi %s150, %s150
                $region57: #{gcn_forward.3} parent=46 // loop_header_branch
                  %218 = sbr.rel (%p216) target = $region61
                $region58: #{gcn_forward.3} parent=46 // loop_body
                  %v222 = vld [vmem:[%s220] sm:$0xf]
                  %223 = vst [vmem:[%s221] sm:$0xf] %v222
                  %v224 = vld [vmem:[%s220 + $0x8] sm:$0xf]
                  %225 = vst [vmem:[%s221 + $0x4] sm:$0xf] %v224
                  %v226 = vld [vmem:[%s220 + $0x10] sm:$0xf]
                  %227 = vst [vmem:[%s221 + $0x8] sm:$0xf] %v226
                  %v228 = vld [vmem:[%s220 + $0x18] sm:$0xf]
                  %229 = vst [vmem:[%s221 + $0xc] sm:$0xf] %v228
                  %v230 = vld [vmem:[%s220 + $0x20] sm:$0xf]
                  %231 = vst [vmem:[%s221 + $0x10] sm:$0xf] %v230
                  %v232 = vld [vmem:[%s220 + $0x28] sm:$0xf]
                  %233 = vst [vmem:[%s221 + $0x14] sm:$0xf] %v232
                  %v234 = vld [vmem:[%s220 + $0x30] sm:$0xf]
                  %235 = vst [vmem:[%s221 + $0x18] sm:$0xf] %v234
                  %v236 = vld [vmem:[%s220 + $0x38] sm:$0xf]
                  %237 = vst [vmem:[%s221 + $0x1c] sm:$0xf] %v236
                  %v238 = vld [vmem:[%s220 + $0x40] sm:$0xf]
                  %239 = vst [vmem:[%s221 + $0x20] sm:$0xf] %v238
                  %v240 = vld [vmem:[%s220 + $0x48] sm:$0xf]
                  %241 = vst [vmem:[%s221 + $0x24] sm:$0xf] %v240
                  %v242 = vld [vmem:[%s220 + $0x50] sm:$0xf]
                  %243 = vst [vmem:[%s221 + $0x28] sm:$0xf] %v242
                  %v244 = vld [vmem:[%s220 + $0x58] sm:$0xf]
                  %245 = vst [vmem:[%s221 + $0x2c] sm:$0xf] %v244
                  %v246 = vld [vmem:[%s220 + $0x60] sm:$0xf]
                  %247 = vst [vmem:[%s221 + $0x30] sm:$0xf] %v246
                  %v248 = vld [vmem:[%s220 + $0x68] sm:$0xf]
                  %249 = vst [vmem:[%s221 + $0x34] sm:$0xf] %v248
                  %v250 = vld [vmem:[%s220 + $0x70] sm:$0xf]
                  %251 = vst [vmem:[%s221 + $0x38] sm:$0xf] %v250
                  %v252 = vld [vmem:[%s220 + $0x78] sm:$0xf]
                  %253 = vst [vmem:[%s221 + $0x3c] sm:$0xf] %v252
                $region59: #{gcn_forward.3} parent=46 // loop_footer
                  %s219 = sadd.s32 1, %s215
                $region60: #{gcn_forward.3} parent=46 // loop_footer_branch
                  %214 = sbr.rel target = $region56
                $region61: #{gcn_forward.3} parent=46 // loop_exit
                  _
              $region47: #{gcn_forward.3} parent=31 // pred_fallthru
                _
            $region32: #{gcn_forward.3} parent=27 // pred_fallthru
              _
            // Predicated region
            $region33: #{gcn_forward.3} parent=27 // pred_check
              _
            $region34: #{gcn_forward.3} parent=27 // pred_check_branch
              %161 = sbr.rel (0) target = $region36
            $region35: #{gcn_forward.3} parent=27 // pred_region
              loop: start=0, step=1, limit=1
              $region37: #{gcn_forward.3} parent=35 // loop_pre_header
                _
              $region38: #{gcn_forward.3} parent=35 // loop_header
                %s164 = sphi 0, %s168
                %p165 = scmp.ge.s32.totalorder %s164, 1
                %s169 = sphi %s155, %s155
                %s170 = sphi %s150, %s150
              $region39: #{gcn_forward.3} parent=35 // loop_header_branch
                %167 = sbr.rel (%p165) target = $region43
              $region40: #{gcn_forward.3} parent=35 // loop_body
                %v171 = vld [vmem:[%s169] sm:$0xf]
                %172 = vst [vmem:[%s170] sm:$0xf] %v171
                %v173 = vld [vmem:[%s169 + $0x8] sm:$0xf]
                %174 = vst [vmem:[%s170 + $0x4] sm:$0xf] %v173
                %v175 = vld [vmem:[%s169 + $0x10] sm:$0xf]
                %176 = vst [vmem:[%s170 + $0x8] sm:$0xf] %v175
                %v177 = vld [vmem:[%s169 + $0x18] sm:$0xf]
                %178 = vst [vmem:[%s170 + $0xc] sm:$0xf] %v177
                %v179 = vld [vmem:[%s169 + $0x20] sm:$0xf]
                %180 = vst [vmem:[%s170 + $0x10] sm:$0xf] %v179
                %v181 = vld [vmem:[%s169 + $0x28] sm:$0xf]
                %182 = vst [vmem:[%s170 + $0x14] sm:$0xf] %v181
                %v183 = vld [vmem:[%s169 + $0x30] sm:$0xf]
                %184 = vst [vmem:[%s170 + $0x18] sm:$0xf] %v183
                %v185 = vld [vmem:[%s169 + $0x38] sm:$0xf]
                %186 = vst [vmem:[%s170 + $0x1c] sm:$0xf] %v185
                %v187 = vld [vmem:[%s169 + $0x40] sm:$0xf]
                %188 = vst [vmem:[%s170 + $0x20] sm:$0xf] %v187
                %v189 = vld [vmem:[%s169 + $0x48] sm:$0xf]
                %190 = vst [vmem:[%s170 + $0x24] sm:$0xf] %v189
                %v191 = vld [vmem:[%s169 + $0x50] sm:$0xf]
                %192 = vst [vmem:[%s170 + $0x28] sm:$0xf] %v191
                %v193 = vld [vmem:[%s169 + $0x58] sm:$0xf]
                %194 = vst [vmem:[%s170 + $0x2c] sm:$0xf] %v193
                %v195 = vld [vmem:[%s169 + $0x60] sm:$0xf]
                %196 = vst [vmem:[%s170 + $0x30] sm:$0xf] %v195
                %v197 = vld [vmem:[%s169 + $0x68] sm:$0xf]
                %198 = vst [vmem:[%s170 + $0x34] sm:$0xf] %v197
                %v199 = vld [vmem:[%s169 + $0x70] sm:$0xf]
                %200 = vst [vmem:[%s170 + $0x38] sm:$0xf] %v199
                %v201 = vld [vmem:[%s169 + $0x78] sm:$0xf]
                %202 = vst [vmem:[%s170 + $0x3c] sm:$0xf] %v201
              $region41: #{gcn_forward.3} parent=35 // loop_footer
                %s168 = sadd.s32 1, %s164
              $region42: #{gcn_forward.3} parent=35 // loop_footer_branch
                %163 = sbr.rel target = $region38
              $region43: #{gcn_forward.3} parent=35 // loop_exit
                _
            $region36: #{gcn_forward.3} parent=27 // pred_fallthru
              _
          $region28: #{gcn_forward.3} parent=23 // pred_fallthru
            _
          %254 = vnop
        $region24: #{gcn_forward.3} parent=19 // pred_fallthru
          _
        // Predicated region
        $region62: #{gcn_forward.3} parent=19 // pred_check
          %p255 = pneg %p69
        $region63: #{gcn_forward.3} parent=19 // pred_check_branch
          %257 = sbr.rel (%p255) target = $region65
        $region64: #{gcn_forward.3} parent=19 // pred_region
          %s258 = smul.u32 16, %s17
          %p259 = scmp.lt.s32.totalorder %s258, 31
          %s260 = scalar_select %p259, %s258, 31
          %s261 = smul.addr %s260, 4
          %s262 = scalar_lea.vmem %s1, %s261
          %s263 = smul.u32 16, %s17
        $region65: #{gcn_forward.3} parent=19 // pred_fallthru
          _
      $region20: #{gcn_forward.3} parent=5 // pred_fallthru
        _
      %p264 = scmp.le.s32.totalorder 1, %s9
      %p265 = scmp.lt.s32.totalorder %s9, 5
      %p266 = pnand %p264, %p265
      %p267 = pneg %p266
      // Predicated region
      $region66: #{gcn_forward.3} parent=5 // pred_check
        _
      $region67: #{gcn_forward.3} parent=5 // pred_check_branch
        %269 = sbr.rel (%p266) target = $region69
      $region68: #{gcn_forward.3} parent=5 // pred_region
        %s270 = ssub.s32 %s9, 1
        %s271 = sand.u32 %s36, 1
        %s272 = sand.u32 %s36, 1
        %s273 = smul.addr %s272, 64
        %s274 = scalar_lea.vmem [#allocation3], %s273
        // Predicated region
        $region70: #{gcn_forward.3} parent=68 // pred_check
          %p275 = pneg %p49
        $region71: #{gcn_forward.3} parent=68 // pred_check_branch
          %277 = sbr.rel (%p275) target = $region73
        $region72: #{gcn_forward.3} parent=68 // pred_region
          _
        $region73: #{gcn_forward.3} parent=68 // pred_fallthru
          _
        %s278 = sand.u32 %s36, 1
        %s279 = sand.u32 %s36, 1
        %s280 = smul.addr %s279, 64
        %s281 = scalar_lea.vmem [#allocation3], %s280
        %p282 = pneg %p49
        %p283 = pneg %p46
        %s284 = smul.u32 16, %s19
        %p285 = scmp.lt.s32.totalorder %s284, 31
        %s286 = scalar_select %p285, %s284, 31
        %s287 = smul.addr %s286, 4
        %s288 = scalar_lea.vmem %s1, %s287
        %p289 = pneg %p75
        %p290 = pneg %p72
        %p291 = pneg %p96
        %p292 = pneg %p93
        %p293 = pneg %p122
        %p294 = pneg %p119
        %s295 = smul.u32 16, %s18
        %p296 = scmp.lt.s32.totalorder %s295, 31
        %s297 = scalar_select %p296, %s295, 31
        %s298 = smul.addr %s297, 8
        %s299 = scalar_lea.vmem %s3, %s298
        %s300 = smul.u32 16, %s18
        %s301 = smul.u32 16, %s19
        %p302 = scmp.lt.s32.totalorder %s301, 31
        %s303 = scalar_select %p302, %s301, 31
        %s304 = smul.addr %s303, 4
        %s305 = scalar_lea.vmem %s1, %s304
        %s306 = smul.u32 16, %s19
        %s307 = smul.u32 16, %s18
        %p308 = scmp.lt.s32.totalorder %s307, 31
        %s309 = scalar_select %p308, %s307, 31
        %s310 = smul.addr %s309, 8
        %s311 = scalar_lea.vmem %s3, %s310
        %s312 = smul.u32 16, %s18
        %p314 = scmp.eq.s32.totalorder %s19, 0
        // Predicated region
        $region74: #{gcn_forward.3} parent=68 // pred_check
          %p315 = pneg %p314
        $region75: #{gcn_forward.3} parent=68 // pred_check_branch
          %317 = sbr.rel (%p315) target = $region77
        $region76: #{gcn_forward.3} parent=68 // pred_region
          %318 = vst [vmem:[#allocation2] sm:$0xff] 0.0
          %319 = vst [vmem:[#allocation2 + $0x8] sm:$0xff] 0.0
          %320 = vst [vmem:[#allocation2 + $0x10] sm:$0xff] 0.0
          %321 = vst [vmem:[#allocation2 + $0x18] sm:$0xff] 0.0
          %322 = vst [vmem:[#allocation2 + $0x20] sm:$0xff] 0.0
          %323 = vst [vmem:[#allocation2 + $0x28] sm:$0xff] 0.0
          %324 = vst [vmem:[#allocation2 + $0x30] sm:$0xff] 0.0
          %325 = vst [vmem:[#allocation2 + $0x38] sm:$0xff] 0.0
          %326 = vst [vmem:[#allocation2 + $0x40] sm:$0xff] 0.0
          %327 = vst [vmem:[#allocation2 + $0x48] sm:$0xff] 0.0
          %328 = vst [vmem:[#allocation2 + $0x50] sm:$0xff] 0.0
          %329 = vst [vmem:[#allocation2 + $0x58] sm:$0xff] 0.0
          %330 = vst [vmem:[#allocation2 + $0x60] sm:$0xff] 0.0
          %331 = vst [vmem:[#allocation2 + $0x68] sm:$0xff] 0.0
          %332 = vst [vmem:[#allocation2 + $0x70] sm:$0xff] 0.0
          %333 = vst [vmem:[#allocation2 + $0x78] sm:$0xff] 0.0
        $region77: #{gcn_forward.3} parent=68 // pred_fallthru
          _
        %v334 = vld [vmem:[#allocation2] sm:$0xff]
        %v335 = vld [vmem:[#allocation2 + $0x8] sm:$0xff]
        %v336 = vld [vmem:[#allocation2 + $0x10] sm:$0xff]
        %v337 = vld [vmem:[#allocation2 + $0x18] sm:$0xff]
        %v338 = vld [vmem:[#allocation2 + $0x20] sm:$0xff]
        %v339 = vld [vmem:[#allocation2 + $0x28] sm:$0xff]
        %v340 = vld [vmem:[#allocation2 + $0x30] sm:$0xff]
        %v341 = vld [vmem:[#allocation2 + $0x38] sm:$0xff]
        %v342 = vld [vmem:[#allocation2 + $0x40] sm:$0xff]
        %v343 = vld [vmem:[#allocation2 + $0x48] sm:$0xff]
        %v344 = vld [vmem:[#allocation2 + $0x50] sm:$0xff]
        %v345 = vld [vmem:[#allocation2 + $0x58] sm:$0xff]
        %v346 = vld [vmem:[#allocation2 + $0x60] sm:$0xff]
        %v347 = vld [vmem:[#allocation2 + $0x68] sm:$0xff]
        %v348 = vld [vmem:[#allocation2 + $0x70] sm:$0xff]
        %v349 = vld [vmem:[#allocation2 + $0x78] sm:$0xff]
        %v350 = vld [vmem:[%s274] sm:$0xf]
        %v351 = vld [vmem:[%s274 + $0x4] sm:$0xf]
        %v352 = vld [vmem:[%s274 + $0x8] sm:$0xf]
        %v353 = vld [vmem:[%s274 + $0xc] sm:$0xf]
        %v354 = vld [vmem:[%s274 + $0x10] sm:$0xf]
        %v355 = vld [vmem:[%s274 + $0x14] sm:$0xf]
        %v356 = vld [vmem:[%s274 + $0x18] sm:$0xf]
        %v357 = vld [vmem:[%s274 + $0x1c] sm:$0xf]
        %v358 = vld [vmem:[%s274 + $0x20] sm:$0xf]
        %v359 = vld [vmem:[%s274 + $0x24] sm:$0xf]
        %v360 = vld [vmem:[%s274 + $0x28] sm:$0xf]
        %v361 = vld [vmem:[%s274 + $0x2c] sm:$0xf]
        %v362 = vld [vmem:[%s274 + $0x30] sm:$0xf]
        %v363 = vld [vmem:[%s274 + $0x34] sm:$0xf]
        %v364 = vld [vmem:[%s274 + $0x38] sm:$0xf]
        %v365 = vld [vmem:[%s274 + $0x3c] sm:$0xf]
        %v366 = vld [vmem:[%s305] sm:$0xf]
        %v367 = vld [vmem:[%s305 + $0x4] sm:$0xf]
        %v368 = vld [vmem:[%s305 + $0x8] sm:$0xf]
        %v369 = vld [vmem:[%s305 + $0xc] sm:$0xf]
        %v370 = vld [vmem:[%s305 + $0x10] sm:$0xf]
        %v371 = vld [vmem:[%s305 + $0x14] sm:$0xf]
        %v372 = vld [vmem:[%s305 + $0x18] sm:$0xf]
        %v373 = vld [vmem:[%s305 + $0x1c] sm:$0xf]
        %v374 = vld [vmem:[%s305 + $0x20] sm:$0xf]
        %v375 = vld [vmem:[%s305 + $0x24] sm:$0xf]
        %v376 = vld [vmem:[%s305 + $0x28] sm:$0xf]
        %v377 = vld [vmem:[%s305 + $0x2c] sm:$0xf]
        %v378 = vld [vmem:[%s305 + $0x30] sm:$0xf]
        %v379 = vld [vmem:[%s305 + $0x34] sm:$0xf]
        %v380 = vld [vmem:[%s305 + $0x38] sm:$0xf]
        %v381 = vld [vmem:[%s305 + $0x3c] sm:$0xf]
        %v398 = vunpack.c.l.b16 %v350
        %v399 = vunpack.c.l.b16 %v351
        %v400 = vunpack.c.l.b16 %v352
        %v401 = vunpack.c.l.b16 %v353
        %v402 = vunpack.c.l.b16 %v354
        %v403 = vunpack.c.l.b16 %v355
        %v404 = vunpack.c.l.b16 %v356
        %v405 = vunpack.c.l.b16 %v357
        %v406 = vunpack.c.l.b16 %v358
        %v407 = vunpack.c.l.b16 %v359
        %v408 = vunpack.c.l.b16 %v360
        %v409 = vunpack.c.l.b16 %v361
        %v410 = vunpack.c.l.b16 %v362
        %v411 = vunpack.c.l.b16 %v363
        %v412 = vunpack.c.l.b16 %v364
        %v413 = vunpack.c.l.b16 %v365
        %v414 = vpack.c.b16 %v399, %v398
        %v415 = vpack.c.b16 %v401, %v400
        %v416 = vpack.c.b16 %v403, %v402
        %v417 = vpack.c.b16 %v405, %v404
        %v418 = vpack.c.b16 %v407, %v406
        %v419 = vpack.c.b16 %v409, %v408
        %v420 = vpack.c.b16 %v411, %v410
        %v421 = vpack.c.b16 %v413, %v412
        %v446 = vunpack.c.l.b16 %v366
        %v447 = vunpack.c.l.b16 %v367
        %v448 = vunpack.c.l.b16 %v368
        %v449 = vunpack.c.l.b16 %v369
        %v450 = vunpack.c.l.b16 %v370
        %v451 = vunpack.c.l.b16 %v371
        %v452 = vunpack.c.l.b16 %v372
        %v453 = vunpack.c.l.b16 %v373
        %v454 = vunpack.c.l.b16 %v374
        %v455 = vunpack.c.l.b16 %v375
        %v456 = vunpack.c.l.b16 %v376
        %v457 = vunpack.c.l.b16 %v377
        %v458 = vunpack.c.l.b16 %v378
        %v459 = vunpack.c.l.b16 %v379
        %v460 = vunpack.c.l.b16 %v380
        %v461 = vunpack.c.l.b16 %v381
        %v462 = vpack.c.b16 %v447, %v446
        %v463 = vpack.c.b16 %v449, %v448
        %v464 = vpack.c.b16 %v451, %v450
        %v465 = vpack.c.b16 %v453, %v452
        %v466 = vpack.c.b16 %v455, %v454
        %v467 = vpack.c.b16 %v457, %v456
        %v468 = vpack.c.b16 %v459, %v458
        %v469 = vpack.c.b16 %v461, %v460
        %478 = vmatprep.subr.bf16.mxu0 0
        %479 = vmatpush1.bf16.msra.mxu0 %v462
        %480 = vmatprep.subr.bf16.mxu0 0
        %481 = vmatpush1.bf16.msra.mxu0 %v463
        %482 = vmatprep.subr.bf16.mxu0 0
        %483 = vmatpush1.bf16.msra.mxu0 %v464
        %484 = vmatprep.subr.bf16.mxu0 0
        %485 = vmatpush1.bf16.msra.mxu0 %v465
        %486 = vmatprep.subr.bf16.mxu0 0
        %487 = vmatpush1.bf16.msra.mxu0 %v466
        %488 = vmatprep.subr.bf16.mxu0 0
        %489 = vmatpush1.bf16.msra.mxu0 %v467
        %490 = vmatprep.subr.bf16.mxu0 0
        %491 = vmatpush1.bf16.msra.mxu0 %v468
        %492 = vmatprep.subr.bf16.mxu0 0
        %493 = vmatpush1.bf16.msra.mxu0 %v469
        %494 = vmatprep.subr.bf16.mxu0 0
        %495 = vmatpush1.bf16.msra.mxu0 0
        %496 = vmatprep.subr.bf16.mxu0 0
        %497 = vmatpush1.bf16.msra.mxu0 0
        %498 = vmatprep.subr.bf16.mxu0 0
        %499 = vmatpush1.bf16.msra.mxu0 0
        %500 = vmatprep.subr.bf16.mxu0 0
        %501 = vmatpush1.bf16.msra.mxu0 0
        %502 = vmatprep.subr.bf16.mxu0 0
        %503 = vmatpush1.bf16.msra.mxu0 0
        %504 = vmatprep.subr.bf16.mxu0 0
        %505 = vmatpush1.bf16.msra.mxu0 0
        %506 = vmatprep.subr.bf16.mxu0 0
        %507 = vmatpush1.bf16.msra.mxu0 0
        %508 = vmatprep.subr.bf16.mxu0 0
        %509 = vmatpush1.bf16.msra.mxu0 0
        %510 = vmatprep.mubr.bf16.mxu0 0
        %511 = vmatmul.mubr.bf16.gmra.mrb[0].mxu0 %v414
        %v512 = vpop.f32.mrb[0].mxu0
        %v513 = vadd.f32 0.0, %v512
        %v514 = vpop.f32.mrb[0].mxu0
        %v515 = vpop.f32.mrb[0].mxu0
        %v516 = vadd.f32 0.0, %v515
        %v517 = vpop.f32.mrb[0].mxu0
        %518 = vmatprep.mubr.bf16.mxu0 0
        %519 = vmatmul.mubr.bf16.gmra.mrb[0].mxu0 %v415
        %v520 = vpop.f32.mrb[0].mxu0
        %v521 = vadd.f32 0.0, %v520
        %v522 = vpop.f32.mrb[0].mxu0
        %v523 = vpop.f32.mrb[0].mxu0
        %v524 = vadd.f32 0.0, %v523
        %v525 = vpop.f32.mrb[0].mxu0
        %526 = vmatprep.mubr.bf16.mxu0 0
        %527 = vmatmul.mubr.bf16.gmra.mrb[0].mxu0 %v416
        %v528 = vpop.f32.mrb[0].mxu0
        %v529 = vadd.f32 0.0, %v528
        %v530 = vpop.f32.mrb[0].mxu0
        %v531 = vpop.f32.mrb[0].mxu0
        %v532 = vadd.f32 0.0, %v531
        %v533 = vpop.f32.mrb[0].mxu0
        %534 = vmatprep.mubr.bf16.mxu0 0
        %535 = vmatmul.mubr.bf16.gmra.mrb[0].mxu0 %v417
        %v536 = vpop.f32.mrb[0].mxu0
        %v537 = vadd.f32 0.0, %v536
        %v538 = vpop.f32.mrb[0].mxu0
        %v539 = vpop.f32.mrb[0].mxu0
        %v540 = vadd.f32 0.0, %v539
        %v541 = vpop.f32.mrb[0].mxu0
        %542 = vmatprep.mubr.bf16.mxu0 0
        %543 = vmatmul.mubr.bf16.gmra.mrb[0].mxu0 %v418
        %v544 = vpop.f32.mrb[0].mxu0
        %v545 = vadd.f32 0.0, %v544
        %v546 = vpop.f32.mrb[0].mxu0
        %v547 = vpop.f32.mrb[0].mxu0
        %v548 = vadd.f32 0.0, %v547
        %v549 = vpop.f32.mrb[0].mxu0
        %550 = vmatprep.mubr.bf16.mxu0 0
        %551 = vmatmul.mubr.bf16.gmra.mrb[0].mxu0 %v419
        %v552 = vpop.f32.mrb[0].mxu0
        %v553 = vadd.f32 0.0, %v552
        %v554 = vpop.f32.mrb[0].mxu0
        %v555 = vpop.f32.mrb[0].mxu0
        %v556 = vadd.f32 0.0, %v555
        %v557 = vpop.f32.mrb[0].mxu0
        %558 = vmatprep.mubr.bf16.mxu0 0
        %559 = vmatmul.mubr.bf16.gmra.mrb[0].mxu0 %v420
        %v560 = vpop.f32.mrb[0].mxu0
        %v561 = vadd.f32 0.0, %v560
        %v562 = vpop.f32.mrb[0].mxu0
        %v563 = vpop.f32.mrb[0].mxu0
        %v564 = vadd.f32 0.0, %v563
        %v565 = vpop.f32.mrb[0].mxu0
        %566 = vmatprep.mubr.bf16.mxu0 0
        %567 = vmatmul.mubr.bf16.gmra.mrb[0].mxu0 %v421
        %v568 = vpop.f32.mrb[0].mxu0
        %v569 = vadd.f32 0.0, %v568
        %v570 = vpop.f32.mrb[0].mxu0
        %v571 = vpop.f32.mrb[0].mxu0
        %v572 = vadd.f32 0.0, %v571
        %v573 = vpop.f32.mrb[0].mxu0
        %574 = vdwg.mxu0
        %v575 = vadd.f32 %v334, %v513
        %v576 = vadd.f32 %v335, %v516
        %v577 = vadd.f32 %v336, %v521
        %v578 = vadd.f32 %v337, %v524
        %v579 = vadd.f32 %v338, %v529
        %v580 = vadd.f32 %v339, %v532
        %v581 = vadd.f32 %v340, %v537
        %v582 = vadd.f32 %v341, %v540
        %v583 = vadd.f32 %v342, %v545
        %v584 = vadd.f32 %v343, %v548
        %v585 = vadd.f32 %v344, %v553
        %v586 = vadd.f32 %v345, %v556
        %v587 = vadd.f32 %v346, %v561
        %v588 = vadd.f32 %v347, %v564
        %v589 = vadd.f32 %v348, %v569
        %v590 = vadd.f32 %v349, %v572
        %591 = vst [vmem:[#allocation2] sm:$0xff] %v575
        %592 = vst [vmem:[#allocation2 + $0x8] sm:$0xff] %v576
        %593 = vst [vmem:[#allocation2 + $0x10] sm:$0xff] %v577
        %594 = vst [vmem:[#allocation2 + $0x18] sm:$0xff] %v578
        %595 = vst [vmem:[#allocation2 + $0x20] sm:$0xff] %v579
        %596 = vst [vmem:[#allocation2 + $0x28] sm:$0xff] %v580
        %597 = vst [vmem:[#allocation2 + $0x30] sm:$0xff] %v581
        %598 = vst [vmem:[#allocation2 + $0x38] sm:$0xff] %v582
        %599 = vst [vmem:[#allocation2 + $0x40] sm:$0xff] %v583
        %600 = vst [vmem:[#allocation2 + $0x48] sm:$0xff] %v584
        %601 = vst [vmem:[#allocation2 + $0x50] sm:$0xff] %v585
        %602 = vst [vmem:[#allocation2 + $0x58] sm:$0xff] %v586
        %603 = vst [vmem:[#allocation2 + $0x60] sm:$0xff] %v587
        %604 = vst [vmem:[#allocation2 + $0x68] sm:$0xff] %v588
        %605 = vst [vmem:[#allocation2 + $0x70] sm:$0xff] %v589
        %606 = vst [vmem:[#allocation2 + $0x78] sm:$0xff] %v590
        %p607 = scmp.eq.s32.totalorder %s19, 1
        // Predicated region
        $region78: #{gcn_forward.3} parent=68 // pred_check
          %p608 = pneg %p607
        $region79: #{gcn_forward.3} parent=68 // pred_check_branch
          %610 = sbr.rel (%p608) target = $region81
        $region80: #{gcn_forward.3} parent=68 // pred_region
          %v611 = vld [vmem:[#allocation2] sm:$0xff]
          %v612 = vld [vmem:[#allocation2 + $0x8] sm:$0xff]
          %v613 = vld [vmem:[#allocation2 + $0x10] sm:$0xff]
          %v614 = vld [vmem:[#allocation2 + $0x18] sm:$0xff]
          %v615 = vld [vmem:[#allocation2 + $0x20] sm:$0xff]
          %v616 = vld [vmem:[#allocation2 + $0x28] sm:$0xff]
          %v617 = vld [vmem:[#allocation2 + $0x30] sm:$0xff]
          %v618 = vld [vmem:[#allocation2 + $0x38] sm:$0xff]
          %v619 = vld [vmem:[#allocation2 + $0x40] sm:$0xff]
          %v620 = vld [vmem:[#allocation2 + $0x48] sm:$0xff]
          %v621 = vld [vmem:[#allocation2 + $0x50] sm:$0xff]
          %v622 = vld [vmem:[#allocation2 + $0x58] sm:$0xff]
          %v623 = vld [vmem:[#allocation2 + $0x60] sm:$0xff]
          %v624 = vld [vmem:[#allocation2 + $0x68] sm:$0xff]
          %v625 = vld [vmem:[#allocation2 + $0x70] sm:$0xff]
          %v626 = vld [vmem:[#allocation2 + $0x78] sm:$0xff]
          %v627 = vld [vmem:[%s2] sm:$0x1]
          %v629 = vlaneseq
          %v630 = vshrl.u32 %v629, 7
          %v631 = vsub.s32 0, %v630
          %v632 = vrot.slane %v627, %v631
          %v634 = vadd.f32 %v611, %v632
          %v635 = vadd.f32 %v612, %v632
          %v636 = vadd.f32 %v613, %v632
          %v637 = vadd.f32 %v614, %v632
          %v638 = vadd.f32 %v615, %v632
          %v639 = vadd.f32 %v616, %v632
          %v640 = vadd.f32 %v617, %v632
          %v641 = vadd.f32 %v618, %v632
          %v642 = vadd.f32 %v619, %v632
          %v643 = vadd.f32 %v620, %v632
          %v644 = vadd.f32 %v621, %v632
          %v645 = vadd.f32 %v622, %v632
          %v646 = vadd.f32 %v623, %v632
          %v647 = vadd.f32 %v624, %v632
          %v648 = vadd.f32 %v625, %v632
          %v649 = vadd.f32 %v626, %v632
          %v650 = vlaneseq
          %v651 = vand.u32 %v650, 127
          %vm652 = vcmp.lt.s32.totalorder %v651, 8
          %v653 = vsel %vm652, %v634, -inf
          %v654 = vsel %vm652, %v635, -inf
          %v655 = vsel %vm652, %v636, -inf
          %v656 = vsel %vm652, %v637, -inf
          %v657 = vsel %vm652, %v638, -inf
          %v658 = vsel %vm652, %v639, -inf
          %v659 = vsel %vm652, %v640, -inf
          %v660 = vsel %vm652, %v641, -inf
          %v661 = vsel %vm652, %v642, -inf
          %v662 = vsel %vm652, %v643, -inf
          %v663 = vsel %vm652, %v644, -inf
          %v664 = vsel %vm652, %v645, -inf
          %v665 = vsel %vm652, %v646, -inf
          %v666 = vsel %vm652, %v647, -inf
          %v667 = vsel %vm652, %v648, -inf
          %v668 = vsel %vm652, %v649, -inf
          %669 = vmax.xlane.f32.xlu0 %v653
          %v670 = vpop.xlane.xlu0 %669
          %671 = vmax.xlane.f32.xlu0 %v654
          %v672 = vpop.xlane.xlu0 %671
          %673 = vmax.xlane.f32.xlu0 %v655
          %v674 = vpop.xlane.xlu0 %673
          %675 = vmax.xlane.f32.xlu0 %v656
          %v676 = vpop.xlane.xlu0 %675
          %677 = vmax.xlane.f32.xlu0 %v657
          %v678 = vpop.xlane.xlu0 %677
          %679 = vmax.xlane.f32.xlu0 %v658
          %v680 = vpop.xlane.xlu0 %679
          %681 = vmax.xlane.f32.xlu0 %v659
          %v682 = vpop.xlane.xlu0 %681
          %683 = vmax.xlane.f32.xlu0 %v660
          %v684 = vpop.xlane.xlu0 %683
          %685 = vmax.xlane.f32.xlu0 %v661
          %v686 = vpop.xlane.xlu0 %685
          %687 = vmax.xlane.f32.xlu0 %v662
          %v688 = vpop.xlane.xlu0 %687
          %689 = vmax.xlane.f32.xlu0 %v663
          %v690 = vpop.xlane.xlu0 %689
          %691 = vmax.xlane.f32.xlu0 %v664
          %v692 = vpop.xlane.xlu0 %691
          %693 = vmax.xlane.f32.xlu0 %v665
          %v694 = vpop.xlane.xlu0 %693
          %695 = vmax.xlane.f32.xlu0 %v666
          %v696 = vpop.xlane.xlu0 %695
          %697 = vmax.xlane.f32.xlu0 %v667
          %v698 = vpop.xlane.xlu0 %697
          %699 = vmax.xlane.f32.xlu0 %v668
          %v700 = vpop.xlane.xlu0 %699
          %v701 = vsub.f32 %v653, %v670
          %v702 = vsub.f32 %v654, %v672
          %v703 = vsub.f32 %v655, %v674
          %v704 = vsub.f32 %v656, %v676
          %v705 = vsub.f32 %v657, %v678
          %v706 = vsub.f32 %v658, %v680
          %v707 = vsub.f32 %v659, %v682
          %v708 = vsub.f32 %v660, %v684
          %v709 = vsub.f32 %v661, %v686
          %v710 = vsub.f32 %v662, %v688
          %v711 = vsub.f32 %v663, %v690
          %v712 = vsub.f32 %v664, %v692
          %v713 = vsub.f32 %v665, %v694
          %v714 = vsub.f32 %v666, %v696
          %v715 = vsub.f32 %v667, %v698
          %v716 = vsub.f32 %v668, %v700
          %v717 = vmul.f32 %v701, 1.442695
          %v718 = vpow.pop %v717
          %v719 = vmul.f32 %v702, 1.442695
          %v720 = vpow.pop %v719
          %v721 = vmul.f32 %v703, 1.442695
          %v722 = vpow.pop %v721
          %v723 = vmul.f32 %v704, 1.442695
          %v724 = vpow.pop %v723
          %v725 = vmul.f32 %v705, 1.442695
          %v726 = vpow.pop %v725
          %v727 = vmul.f32 %v706, 1.442695
          %v728 = vpow.pop %v727
          %v729 = vmul.f32 %v707, 1.442695
          %v730 = vpow.pop %v729
          %v731 = vmul.f32 %v708, 1.442695
          %v732 = vpow.pop %v731
          %v733 = vmul.f32 %v709, 1.442695
          %v734 = vpow.pop %v733
          %v735 = vmul.f32 %v710, 1.442695
          %v736 = vpow.pop %v735
          %v737 = vmul.f32 %v711, 1.442695
          %v738 = vpow.pop %v737
          %v739 = vmul.f32 %v712, 1.442695
          %v740 = vpow.pop %v739
          %v741 = vmul.f32 %v713, 1.442695
          %v742 = vpow.pop %v741
          %v743 = vmul.f32 %v714, 1.442695
          %v744 = vpow.pop %v743
          %v745 = vmul.f32 %v715, 1.442695
          %v746 = vpow.pop %v745
          %v747 = vmul.f32 %v716, 1.442695
          %v748 = vpow.pop %v747
          %v749 = vsel %vm652, %v718, 0.0
          %v750 = vsel %vm652, %v720, 0.0
          %v751 = vsel %vm652, %v722, 0.0
          %v752 = vsel %vm652, %v724, 0.0
          %v753 = vsel %vm652, %v726, 0.0
          %v754 = vsel %vm652, %v728, 0.0
          %v755 = vsel %vm652, %v730, 0.0
          %v756 = vsel %vm652, %v732, 0.0
          %v757 = vsel %vm652, %v734, 0.0
          %v758 = vsel %vm652, %v736, 0.0
          %v759 = vsel %vm652, %v738, 0.0
          %v760 = vsel %vm652, %v740, 0.0
          %v761 = vsel %vm652, %v742, 0.0
          %v762 = vsel %vm652, %v744, 0.0
          %v763 = vsel %vm652, %v746, 0.0
          %v764 = vsel %vm652, %v748, 0.0
          %765 = vadd.xlane.f32.xlu0 %v749
          %v766 = vpop.xlane.xlu0 %765
          %767 = vadd.xlane.f32.xlu0 %v750
          %v768 = vpop.xlane.xlu0 %767
          %769 = vadd.xlane.f32.xlu0 %v751
          %v770 = vpop.xlane.xlu0 %769
          %771 = vadd.xlane.f32.xlu0 %v752
          %v772 = vpop.xlane.xlu0 %771
          %773 = vadd.xlane.f32.xlu0 %v753
          %v774 = vpop.xlane.xlu0 %773
          %775 = vadd.xlane.f32.xlu0 %v754
          %v776 = vpop.xlane.xlu0 %775
          %777 = vadd.xlane.f32.xlu0 %v755
          %v778 = vpop.xlane.xlu0 %777
          %779 = vadd.xlane.f32.xlu0 %v756
          %v780 = vpop.xlane.xlu0 %779
          %781 = vadd.xlane.f32.xlu0 %v757
          %v782 = vpop.xlane.xlu0 %781
          %783 = vadd.xlane.f32.xlu0 %v758
          %v784 = vpop.xlane.xlu0 %783
          %785 = vadd.xlane.f32.xlu0 %v759
          %v786 = vpop.xlane.xlu0 %785
          %787 = vadd.xlane.f32.xlu0 %v760
          %v788 = vpop.xlane.xlu0 %787
          %789 = vadd.xlane.f32.xlu0 %v761
          %v790 = vpop.xlane.xlu0 %789
          %791 = vadd.xlane.f32.xlu0 %v762
          %v792 = vpop.xlane.xlu0 %791
          %793 = vadd.xlane.f32.xlu0 %v763
          %v794 = vpop.xlane.xlu0 %793
          %795 = vadd.xlane.f32.xlu0 %v764
          %v796 = vpop.xlane.xlu0 %795
          %v797 = vlog2.pop %v766
          %v798 = vmul.f32 %v797, 0.6931472
          %v799 = vlog2.pop %v768
          %v800 = vmul.f32 %v799, 0.6931472
          %v801 = vlog2.pop %v770
          %v802 = vmul.f32 %v801, 0.6931472
          %v803 = vlog2.pop %v772
          %v804 = vmul.f32 %v803, 0.6931472
          %v805 = vlog2.pop %v774
          %v806 = vmul.f32 %v805, 0.6931472
          %v807 = vlog2.pop %v776
          %v808 = vmul.f32 %v807, 0.6931472
          %v809 = vlog2.pop %v778
          %v810 = vmul.f32 %v809, 0.6931472
          %v811 = vlog2.pop %v780
          %v812 = vmul.f32 %v811, 0.6931472
          %v813 = vlog2.pop %v782
          %v814 = vmul.f32 %v813, 0.6931472
          %v815 = vlog2.pop %v784
          %v816 = vmul.f32 %v815, 0.6931472
          %v817 = vlog2.pop %v786
          %v818 = vmul.f32 %v817, 0.6931472
          %v819 = vlog2.pop %v788
          %v820 = vmul.f32 %v819, 0.6931472
          %v821 = vlog2.pop %v790
          %v822 = vmul.f32 %v821, 0.6931472
          %v823 = vlog2.pop %v792
          %v824 = vmul.f32 %v823, 0.6931472
          %v825 = vlog2.pop %v794
          %v826 = vmul.f32 %v825, 0.6931472
          %v827 = vlog2.pop %v796
          %v828 = vmul.f32 %v827, 0.6931472
          %v829 = vsub.f32 %v701, %v798
          %v830 = vsub.f32 %v702, %v800
          %v831 = vsub.f32 %v703, %v802
          %v832 = vsub.f32 %v704, %v804
          %v833 = vsub.f32 %v705, %v806
          %v834 = vsub.f32 %v706, %v808
          %v835 = vsub.f32 %v707, %v810
          %v836 = vsub.f32 %v708, %v812
          %v837 = vsub.f32 %v709, %v814
          %v838 = vsub.f32 %v710, %v816
          %v839 = vsub.f32 %v711, %v818
          %v840 = vsub.f32 %v712, %v820
          %v841 = vsub.f32 %v713, %v822
          %v842 = vsub.f32 %v714, %v824
          %v843 = vsub.f32 %v715, %v826
          %v844 = vsub.f32 %v716, %v828
          %v845 = vsel %vm652, %v829, 0.0
          %v846 = vsel %vm652, %v830, 0.0
          %v847 = vsel %vm652, %v831, 0.0
          %v848 = vsel %vm652, %v832, 0.0
          %v849 = vsel %vm652, %v833, 0.0
          %v850 = vsel %vm652, %v834, 0.0
          %v851 = vsel %vm652, %v835, 0.0
          %v852 = vsel %vm652, %v836, 0.0
          %v853 = vsel %vm652, %v837, 0.0
          %v854 = vsel %vm652, %v838, 0.0
          %v855 = vsel %vm652, %v839, 0.0
          %v856 = vsel %vm652, %v840, 0.0
          %v857 = vsel %vm652, %v841, 0.0
          %v858 = vsel %vm652, %v842, 0.0
          %v859 = vsel %vm652, %v843, 0.0
          %v860 = vsel %vm652, %v844, 0.0
          %861 = vst [vmem:[%s311] sm:$0xff] %v845
          %862 = vst [vmem:[%s311 + $0x8] sm:$0xff] %v846
          %863 = vst [vmem:[%s311 + $0x10] sm:$0xff] %v847
          %864 = vst [vmem:[%s311 + $0x18] sm:$0xff] %v848
          %865 = vst [vmem:[%s311 + $0x20] sm:$0xff] %v849
          %866 = vst [vmem:[%s311 + $0x28] sm:$0xff] %v850
          %867 = vst [vmem:[%s311 + $0x30] sm:$0xff] %v851
          %868 = vst [vmem:[%s311 + $0x38] sm:$0xff] %v852
          %869 = vst [vmem:[%s311 + $0x40] sm:$0xff] %v853
          %870 = vst [vmem:[%s311 + $0x48] sm:$0xff] %v854
          %871 = vst [vmem:[%s311 + $0x50] sm:$0xff] %v855
          %872 = vst [vmem:[%s311 + $0x58] sm:$0xff] %v856
          %873 = vst [vmem:[%s311 + $0x60] sm:$0xff] %v857
          %874 = vst [vmem:[%s311 + $0x68] sm:$0xff] %v858
          %875 = vst [vmem:[%s311 + $0x70] sm:$0xff] %v859
          %876 = vst [vmem:[%s311 + $0x78] sm:$0xff] %v860
        $region81: #{gcn_forward.3} parent=68 // pred_fallthru
          _
        %s877 = smul.u32 16, %s18
        %p878 = scmp.lt.s32.totalorder %s877, 31
        %s879 = scalar_select %p878, %s877, 31
        %s880 = smul.addr %s879, 8
        %s881 = scalar_lea.vmem %s3, %s880
        // Predicated region
        $region82: #{gcn_forward.3} parent=68 // pred_check
          %p882 = pneg %p119
        $region83: #{gcn_forward.3} parent=68 // pred_check_branch
          %884 = sbr.rel (%p882) target = $region85
        $region84: #{gcn_forward.3} parent=68 // pred_region
          %s885 = smul.u32 16, %s18
        $region85: #{gcn_forward.3} parent=68 // pred_fallthru
          _
      $region69: #{gcn_forward.3} parent=5 // pred_fallthru
        _
      %p886 = scmp.le.s32.totalorder 2, %s9
      // Predicated region
      $region86: #{gcn_forward.3} parent=5 // pred_check
        %p887 = pneg %p886
      $region87: #{gcn_forward.3} parent=5 // pred_check_branch
        %889 = sbr.rel (%p887) target = $region89
      $region88: #{gcn_forward.3} parent=5 // pred_region
        %s890 = ssub.s32 %s9, 2
        // Predicated region
        $region90: #{gcn_forward.3} parent=88 // pred_check
          %p891 = pneg %p125
        $region91: #{gcn_forward.3} parent=88 // pred_check_branch
          %893 = sbr.rel (%p891) target = $region93
        $region92: #{gcn_forward.3} parent=88 // pred_region
          %s894 = smul.u32 16, %s20
          %p895 = scmp.lt.s32.totalorder %s894, 31
          %s896 = scalar_select %p895, %s894, 31
          %s897 = smul.addr %s896, 8
          %s898 = scalar_lea.vmem %s3, %s897
        $region93: #{gcn_forward.3} parent=88 // pred_fallthru
          _
      $region89: #{gcn_forward.3} parent=5 // pred_fallthru
        _
    $region6: #{gcn_forward.3} parent=1 // loop_footer
      %s13 = sadd.s32 1, %s9
    $region7: #{gcn_forward.3} parent=1 // loop_footer_branch
      %8 = sbr.rel target = $region3
    $region8: #{gcn_forward.3} parent=1 // loop_exit
      _

</llo_original>
